<compile_context>
chip_gen: v6e
topology: v6e:2x2x1
jax: 0.10.0
libtpu: 0.0.40
codegen_flags: <defaults>
</compile_context>

<pallas_src>
import functools

import jax
import jax.numpy as jnp
import numpy as np
from jax import lax
from jax.experimental import pallas as pl
from jax.experimental.pallas import tpu as pltpu

N_POP = 20     # self.N in the module
DIM = 8        # number of idle machines (self.dim) for this synthetic instance
Q = 16         # candidate-queue length per idle machine
GAMMA = 0.9
EP = 50.0
B = 8          # independent GA instances batched into one pallas_call

# Rows of the packed per-instance (8, 128) output slab.
ROW_FIT, ROW_SEL, ROW_MISC = 0, 1, 2   # MISC: lane 0 = best fitness, lane 1 = best index


def ga_step_kernel(xt_ref, pt_ref, u_ref, out_ref, *, r, c):
    # xt_ref : (bp, dim, N) int32  populations, individuals on the lane axis (-1 = skip)
    # pt_ref : (bp, dim, Q) f32    processing time of candidate q on idle machine j
    # u_ref  : (bp, 1, N)   f32    pre-drawn uniforms for roulette-wheel selection
    # out_ref: (bp, 8, 128) f32    packed output slab (rows ROW_*); unwritten lanes unspecified
    bp, dim, n = xt_ref.shape
    q = pt_ref.shape[2]

    # Hoisted iotas / masks (JAX does not CSE broadcast_in_dim -> build once, reuse).
    q_iota = lax.broadcasted_iota(jnp.int32, (q, n), 0)          # candidate index per sublane
    lane = lax.broadcasted_iota(jnp.int32, (1, n), 1)            # individual index per lane
    row_i = lax.broadcasted_iota(jnp.int32, (n, n), 0)
    col_i = lax.broadcasted_iota(jnp.int32, (n, n), 1)
    lower_tri = col_i <= row_i                                   # [k, j]: j <= k

    for bi in range(bp):                                         # unrolled, bp small
        xt = xt_ref[bi]                                          # (dim, n) int32
        pt = pt_ref[bi]                                          # (dim, q) f32
        u_row = u_ref[bi]                                        # (1, n)   f32

        # ---- 1) fitness ----------------------------------------------------
        # total[i] = sum_j pt[j, X[i, j]] via a per-machine one-hot select/reduce.
        # Individuals stay on the lane axis throughout, so fitness, cumulative
        # probs and selection all come out lane-dense with no relayouts of the
        # population.  x == -1 never matches a candidate index -> contributes 0.
        total = jnp.zeros((1, n), jnp.float32)
        for j in range(dim):
            pt_col = pt[j, :][:, None]                           # (q, 1)
            hit = q_iota == xt[j:j + 1, :]                       # (q, n)
            total = total + jnp.sum(jnp.where(hit, pt_col, 0.0),
                                    axis=0, keepdims=True)       # (1, n)

        # An all-(-1) individual schedules nothing: its c/total term is 0 (fitness
        # == r) instead of a clamped-huge value that would dominate the roulette.
        valid = total > 0.0
        fit_row = r + jnp.where(valid, c / jnp.where(valid, total, 1.0), 0.0)  # (1, n)

        # ---- 2) best fitness & first-argmin index ---------------------------
        bestf = jnp.min(fit_row)
        best_idx = jnp.min(jnp.where(fit_row == bestf, lane, n))

        # ---- 3) roulette-wheel selection ------------------------------------
        probs = fit_row / jnp.sum(fit_row)                       # (1, n)
        # exact f32 cumulative probs, column oriented (feeds the pairwise compare)
        cum_col = jnp.sum(jnp.where(lower_tri, probs, 0.0),
                          axis=1, keepdims=True)                 # (n, 1)
        # sel[d] = #{k : cum[k] < u[d]}  == first bucket u[d] falls into
        # (matches the module's "first i with u <= cum[i]" tie-breaking).
        sel_row = jnp.sum((cum_col < u_row).astype(jnp.float32),
                          axis=0, keepdims=True)                 # (1, n)
        sel_row = jnp.minimum(sel_row, float(n - 1))

        misc_row = jnp.where(lane == 0, bestf,
                             jnp.where(lane == 1, best_idx.astype(jnp.float32), 0.0))

        # ---- 4) writeback: three lane-rows per instance ----------------------
        out_ref[bi, ROW_FIT:ROW_FIT + 1, 0:n] = fit_row
        out_ref[bi, ROW_SEL:ROW_SEL + 1, 0:n] = sel_row
        out_ref[bi, ROW_MISC:ROW_MISC + 1, 0:n] = misc_row


def ga_step(x, proc_time, u, *, b_r, num_machines, gamma=GAMMA, ep=EP, steps=None):
    """One GA generation's numeric hot path for a batch of independent instances.

    x         : (B, N, dim) int32   populations (candidate index per idle machine, -1 = skip)
    proc_time : (B, dim, Q) float32 processing time of candidate q on idle machine j
    u         : (B, 1, N)   float32 roulette uniforms (host PRNG; module uses random.random())
    returns   : (B, 8, 128) float32 packed slab:
                  row 0 = fitness[0:N], row 1 = selected parent index[0:N],
                  row 2 lane 0 = best fitness, lane 1 = best individual index.
    """
    bsz, n, dim = x.shape
    q = proc_time.shape[-1]
    assert proc_time.shape == (bsz, dim, q)
    assert u.shape == (bsz, 1, n)
    assert n <= 128, "per-individual rows are packed into 128 lanes"

    if steps is None:
        # 2 parallel grid steps keep both v7x TensorCores busy; on 1-TC chips the
        # extra step costs ~0.35us.  For odd B just run a single step.
        steps = 2 if (bsz >= 2 and bsz % 2 == 0) else 1
    assert bsz % steps == 0
    bp = bsz // steps

    xt = jnp.swapaxes(x.astype(jnp.int32), 1, 2)                 # (B, dim, n): individuals on lanes
    pt = proc_time.astype(jnp.float32)                           # (B, dim, q): dense, lane-major DMA
    u = u.astype(jnp.float32)

    c = float(gamma) * float(ep) / float(num_machines)           # compile-time constant
    kernel = functools.partial(ga_step_kernel, r=float(b_r), c=c)

    return pl.pallas_call(
        kernel,
        grid=(steps,),
        in_specs=[
            pl.BlockSpec((bp, dim, n), lambda s: (s, 0, 0)),
            pl.BlockSpec((bp, dim, q), lambda s: (s, 0, 0)),
            pl.BlockSpec((bp, 1, n), lambda s: (s, 0, 0)),
        ],
        out_specs=pl.BlockSpec((bp, 8, 128), lambda s: (s, 0, 0)),
        out_shape=jax.ShapeDtypeStruct((bsz, 8, 128), jnp.float32),
        compiler_params=pltpu.CompilerParams(
            dimension_semantics=("parallel",)),                  # v7x: shard steps across both TCs
    )(xt, pt, u)


def _reference(b_r, gamma, ep, num_machines, x, proc_time):
    x = np.asarray(x)
    pt = np.asarray(proc_time, dtype=np.float64)
    n, dim = x.shape
    total = np.zeros((n,), np.float64)
    for i in range(n):
        for j in range(dim):
            if x[i, j] >= 0:
                total[i] += pt[j, x[i, j]]
    fitness = b_r + gamma * ep / (num_machines * total)
    bestf = fitness.min()
    best_idx = int(np.argmin(fitness))
    return fitness, bestf, best_idx


if __name__ == "__main__":
    key = jax.random.PRNGKey(0)
    k_pt, k_x, k_u = jax.random.split(key, 3)

    # B independent synthetic scheduling instances: processing times in [1, 10),
    # random populations, a couple of "no candidate op" (-1) slots per instance.
    proc_time = jax.random.uniform(k_pt, (B, DIM, Q), jnp.float32, 1.0, 10.0)
    x = jax.random.randint(k_x, (B, N_POP, DIM), 0, Q, jnp.int32)
    x = x.at[:, 3, 2].set(-1).at[:, 7, 5].set(-1)
    u = jax.random.uniform(k_u, (B, 1, N_POP), jnp.float32)
    b_r = 0.5  # b_r reward argument of GA_trainer

    out = jax.block_until_ready(ga_step(x, proc_time, u, b_r=b_r, num_machines=DIM))
    out_np = np.asarray(out)

    fit = out_np[:, ROW_FIT, :N_POP]
    sel = out_np[:, ROW_SEL, :N_POP].astype(np.int32)
    bestf = out_np[:, ROW_MISC, 0]
    best_idx = out_np[:, ROW_MISC, 1].astype(np.int32)

    x_np = np.asarray(x)
    u_np = np.asarray(u)
    for b in range(B):
        f_ref, bf_ref, bi_ref = _reference(b_r, GAMMA, EP, DIM, x_np[b], proc_time[b])
        np.testing.assert_allclose(fit[b], f_ref, rtol=1e-5, atol=1e-5)
        np.testing.assert_allclose(bestf[b], bf_ref, rtol=1e-5, atol=1e-5)
        assert int(best_idx[b]) == bi_ref
        # best individual: host indexes its own copy of X with the emitted index
        np.testing.assert_array_equal(x_np[b, int(best_idx[b])], x_np[b, bi_ref])
        # selection check against f32 cumulative probs recomputed from the emitted fitness
        probs32 = (fit[b] / np.float32(fit[b].sum())).astype(np.float32)
        cum32 = np.cumsum(probs32).astype(np.float32)
        sel_ref = np.minimum(np.searchsorted(cum32, u_np[b, 0], side="left"),
                             N_POP - 1)
        np.testing.assert_array_equal(sel[b], sel_ref)
        assert np.all(sel[b] >= 0) and np.all(sel[b] < N_POP)

    print("KERNEL_OK")
</pallas_src>

<mosaic_0001>
module attributes {stable_mosaic.version = 11 : i64} {
  func.func @ga_step_kernel(%arg0: i32, %arg1: memref<4x8x20xi32, #tpu.memory_space<vmem>>, %arg2: memref<4x8x16xf32, #tpu.memory_space<vmem>>, %arg3: memref<4x1x20xf32, #tpu.memory_space<vmem>>, %arg4: memref<4x8x128xf32, #tpu.memory_space<vmem>>) attributes {dimension_semantics = [#tpu.dimension_semantics<parallel>], iteration_bounds = array<i64: 2>, scalar_prefetch = 0 : i64, scratch_operands = 0 : i64, tpu.core_type = #tpu.core_type<tc>, window_params = [{transform_indices = @transform_0, window_bounds = array<i64: 4, 8, 20>}, {transform_indices = @transform_1, window_bounds = array<i64: 4, 8, 16>}, {transform_indices = @transform_2, window_bounds = array<i64: 4, 1, 20>}, {transform_indices = @transform_3, window_bounds = array<i64: 4, 8, 128>}]} {
    %0 = tpu.iota {dimensions = array<i32: 0>} : vector<16x20xi32>
    %1 = tpu.iota {dimensions = array<i32: 1>} : vector<1x20xi32>
    %2 = tpu.iota {dimensions = array<i32: 0>} : vector<20x20xi32>
    %3 = tpu.iota {dimensions = array<i32: 1>} : vector<20x20xi32>
    %4 = arith.cmpi sle, %3, %2 : vector<20x20xi32>
    %c0 = arith.constant 0 : index
    %c0_0 = arith.constant 0 : index
    %c0_1 = arith.constant 0 : index
    %5 = vector.load %arg1[%c0, %c0_0, %c0_1] : memref<4x8x20xi32, #tpu.memory_space<vmem>>, vector<1x8x20xi32>
    %6 = vector.shape_cast %5 : vector<1x8x20xi32> to vector<8x20xi32>
    %c0_2 = arith.constant 0 : index
    %c0_3 = arith.constant 0 : index
    %c0_4 = arith.constant 0 : index
    %7 = vector.load %arg2[%c0_2, %c0_3, %c0_4] : memref<4x8x16xf32, #tpu.memory_space<vmem>>, vector<1x8x16xf32>
    %8 = vector.shape_cast %7 : vector<1x8x16xf32> to vector<8x16xf32>
    %c0_5 = arith.constant 0 : index
    %c0_6 = arith.constant 0 : index
    %c0_7 = arith.constant 0 : index
    %9 = vector.load %arg3[%c0_5, %c0_6, %c0_7] : memref<4x1x20xf32, #tpu.memory_space<vmem>>, vector<1x1x20xf32>
    %10 = vector.shape_cast %9 : vector<1x1x20xf32> to vector<1x20xf32>
    %cst = arith.constant 0.000000e+00 : f32
    %11 = vector.broadcast %cst : f32 to vector<1x20xf32>
    %12 = vector.extract_strided_slice %8 {offsets = [0, 0], sizes = [1, 16], strides = [1, 1]} : vector<8x16xf32> to vector<1x16xf32>
    %13 = vector.shape_cast %12 : vector<1x16xf32> to vector<16xf32>
    %14 = vector.shape_cast %13 : vector<16xf32> to vector<16x1xf32>
    %15 = vector.extract_strided_slice %6 {offsets = [0, 0], sizes = [1, 20], strides = [1, 1]} : vector<8x20xi32> to vector<1x20xi32>
    %16 = vector.broadcast %15 : vector<1x20xi32> to vector<16x20xi32>
    %17 = arith.cmpi eq, %0, %16 : vector<16x20xi32>
    %cst_8 = arith.constant 0.000000e+00 : f32
    %18 = vector.shape_cast %14 : vector<16x1xf32> to vector<16x1xf32>
    %19 = vector.broadcast %18 : vector<16x1xf32> to vector<16x20xf32>
    %20 = vector.broadcast %cst_8 : f32 to vector<16x20xf32>
    %21 = arith.select %17, %19, %20 : vector<16x20xi1>, vector<16x20xf32>
    %cst_9 = arith.constant dense<0.000000e+00> : vector<20xf32>
    %22 = vector.multi_reduction <add>, %21, %cst_9 [0] : vector<16x20xf32> to vector<20xf32>
    %23 = vector.shape_cast %22 : vector<20xf32> to vector<1x20xf32>
    %24 = arith.addf %11, %23 : vector<1x20xf32>
    %25 = vector.extract_strided_slice %8 {offsets = [1, 0], sizes = [1, 16], strides = [1, 1]} : vector<8x16xf32> to vector<1x16xf32>
    %26 = vector.shape_cast %25 : vector<1x16xf32> to vector<16xf32>
    %27 = vector.shape_cast %26 : vector<16xf32> to vector<16x1xf32>
    %28 = vector.extract_strided_slice %6 {offsets = [1, 0], sizes = [1, 20], strides = [1, 1]} : vector<8x20xi32> to vector<1x20xi32>
    %29 = vector.broadcast %28 : vector<1x20xi32> to vector<16x20xi32>
    %30 = arith.cmpi eq, %0, %29 : vector<16x20xi32>
    %cst_10 = arith.constant 0.000000e+00 : f32
    %31 = vector.shape_cast %27 : vector<16x1xf32> to vector<16x1xf32>
    %32 = vector.broadcast %31 : vector<16x1xf32> to vector<16x20xf32>
    %33 = vector.broadcast %cst_10 : f32 to vector<16x20xf32>
    %34 = arith.select %30, %32, %33 : vector<16x20xi1>, vector<16x20xf32>
    %cst_11 = arith.constant dense<0.000000e+00> : vector<20xf32>
    %35 = vector.multi_reduction <add>, %34, %cst_11 [0] : vector<16x20xf32> to vector<20xf32>
    %36 = vector.shape_cast %35 : vector<20xf32> to vector<1x20xf32>
    %37 = arith.addf %24, %36 : vector<1x20xf32>
    %38 = vector.extract_strided_slice %8 {offsets = [2, 0], sizes = [1, 16], strides = [1, 1]} : vector<8x16xf32> to vector<1x16xf32>
    %39 = vector.shape_cast %38 : vector<1x16xf32> to vector<16xf32>
    %40 = vector.shape_cast %39 : vector<16xf32> to vector<16x1xf32>
    %41 = vector.extract_strided_slice %6 {offsets = [2, 0], sizes = [1, 20], strides = [1, 1]} : vector<8x20xi32> to vector<1x20xi32>
    %42 = vector.broadcast %41 : vector<1x20xi32> to vector<16x20xi32>
    %43 = arith.cmpi eq, %0, %42 : vector<16x20xi32>
    %cst_12 = arith.constant 0.000000e+00 : f32
    %44 = vector.shape_cast %40 : vector<16x1xf32> to vector<16x1xf32>
    %45 = vector.broadcast %44 : vector<16x1xf32> to vector<16x20xf32>
    %46 = vector.broadcast %cst_12 : f32 to vector<16x20xf32>
    %47 = arith.select %43, %45, %46 : vector<16x20xi1>, vector<16x20xf32>
    %cst_13 = arith.constant dense<0.000000e+00> : vector<20xf32>
    %48 = vector.multi_reduction <add>, %47, %cst_13 [0] : vector<16x20xf32> to vector<20xf32>
    %49 = vector.shape_cast %48 : vector<20xf32> to vector<1x20xf32>
    %50 = arith.addf %37, %49 : vector<1x20xf32>
    %51 = vector.extract_strided_slice %8 {offsets = [3, 0], sizes = [1, 16], strides = [1, 1]} : vector<8x16xf32> to vector<1x16xf32>
    %52 = vector.shape_cast %51 : vector<1x16xf32> to vector<16xf32>
    %53 = vector.shape_cast %52 : vector<16xf32> to vector<16x1xf32>
    %54 = vector.extract_strided_slice %6 {offsets = [3, 0], sizes = [1, 20], strides = [1, 1]} : vector<8x20xi32> to vector<1x20xi32>
    %55 = vector.broadcast %54 : vector<1x20xi32> to vector<16x20xi32>
    %56 = arith.cmpi eq, %0, %55 : vector<16x20xi32>
    %cst_14 = arith.constant 0.000000e+00 : f32
    %57 = vector.shape_cast %53 : vector<16x1xf32> to vector<16x1xf32>
    %58 = vector.broadcast %57 : vector<16x1xf32> to vector<16x20xf32>
    %59 = vector.broadcast %cst_14 : f32 to vector<16x20xf32>
    %60 = arith.select %56, %58, %59 : vector<16x20xi1>, vector<16x20xf32>
    %cst_15 = arith.constant dense<0.000000e+00> : vector<20xf32>
    %61 = vector.multi_reduction <add>, %60, %cst_15 [0] : vector<16x20xf32> to vector<20xf32>
    %62 = vector.shape_cast %61 : vector<20xf32> to vector<1x20xf32>
    %63 = arith.addf %50, %62 : vector<1x20xf32>
    %64 = vector.extract_strided_slice %8 {offsets = [4, 0], sizes = [1, 16], strides = [1, 1]} : vector<8x16xf32> to vector<1x16xf32>
    %65 = vector.shape_cast %64 : vector<1x16xf32> to vector<16xf32>
    %66 = vector.shape_cast %65 : vector<16xf32> to vector<16x1xf32>
    %67 = vector.extract_strided_slice %6 {offsets = [4, 0], sizes = [1, 20], strides = [1, 1]} : vector<8x20xi32> to vector<1x20xi32>
    %68 = vector.broadcast %67 : vector<1x20xi32> to vector<16x20xi32>
    %69 = arith.cmpi eq, %0, %68 : vector<16x20xi32>
    %cst_16 = arith.constant 0.000000e+00 : f32
    %70 = vector.shape_cast %66 : vector<16x1xf32> to vector<16x1xf32>
    %71 = vector.broadcast %70 : vector<16x1xf32> to vector<16x20xf32>
    %72 = vector.broadcast %cst_16 : f32 to vector<16x20xf32>
    %73 = arith.select %69, %71, %72 : vector<16x20xi1>, vector<16x20xf32>
    %cst_17 = arith.constant dense<0.000000e+00> : vector<20xf32>
    %74 = vector.multi_reduction <add>, %73, %cst_17 [0] : vector<16x20xf32> to vector<20xf32>
    %75 = vector.shape_cast %74 : vector<20xf32> to vector<1x20xf32>
    %76 = arith.addf %63, %75 : vector<1x20xf32>
    %77 = vector.extract_strided_slice %8 {offsets = [5, 0], sizes = [1, 16], strides = [1, 1]} : vector<8x16xf32> to vector<1x16xf32>
    %78 = vector.shape_cast %77 : vector<1x16xf32> to vector<16xf32>
    %79 = vector.shape_cast %78 : vector<16xf32> to vector<16x1xf32>
    %80 = vector.extract_strided_slice %6 {offsets = [5, 0], sizes = [1, 20], strides = [1, 1]} : vector<8x20xi32> to vector<1x20xi32>
    %81 = vector.broadcast %80 : vector<1x20xi32> to vector<16x20xi32>
    %82 = arith.cmpi eq, %0, %81 : vector<16x20xi32>
    %cst_18 = arith.constant 0.000000e+00 : f32
    %83 = vector.shape_cast %79 : vector<16x1xf32> to vector<16x1xf32>
    %84 = vector.broadcast %83 : vector<16x1xf32> to vector<16x20xf32>
    %85 = vector.broadcast %cst_18 : f32 to vector<16x20xf32>
    %86 = arith.select %82, %84, %85 : vector<16x20xi1>, vector<16x20xf32>
    %cst_19 = arith.constant dense<0.000000e+00> : vector<20xf32>
    %87 = vector.multi_reduction <add>, %86, %cst_19 [0] : vector<16x20xf32> to vector<20xf32>
    %88 = vector.shape_cast %87 : vector<20xf32> to vector<1x20xf32>
    %89 = arith.addf %76, %88 : vector<1x20xf32>
    %90 = vector.extract_strided_slice %8 {offsets = [6, 0], sizes = [1, 16], strides = [1, 1]} : vector<8x16xf32> to vector<1x16xf32>
    %91 = vector.shape_cast %90 : vector<1x16xf32> to vector<16xf32>
    %92 = vector.shape_cast %91 : vector<16xf32> to vector<16x1xf32>
    %93 = vector.extract_strided_slice %6 {offsets = [6, 0], sizes = [1, 20], strides = [1, 1]} : vector<8x20xi32> to vector<1x20xi32>
    %94 = vector.broadcast %93 : vector<1x20xi32> to vector<16x20xi32>
    %95 = arith.cmpi eq, %0, %94 : vector<16x20xi32>
    %cst_20 = arith.constant 0.000000e+00 : f32
    %96 = vector.shape_cast %92 : vector<16x1xf32> to vector<16x1xf32>
    %97 = vector.broadcast %96 : vector<16x1xf32> to vector<16x20xf32>
    %98 = vector.broadcast %cst_20 : f32 to vector<16x20xf32>
    %99 = arith.select %95, %97, %98 : vector<16x20xi1>, vector<16x20xf32>
    %cst_21 = arith.constant dense<0.000000e+00> : vector<20xf32>
    %100 = vector.multi_reduction <add>, %99, %cst_21 [0] : vector<16x20xf32> to vector<20xf32>
    %101 = vector.shape_cast %100 : vector<20xf32> to vector<1x20xf32>
    %102 = arith.addf %89, %101 : vector<1x20xf32>
    %103 = vector.extract_strided_slice %8 {offsets = [7, 0], sizes = [1, 16], strides = [1, 1]} : vector<8x16xf32> to vector<1x16xf32>
    %104 = vector.shape_cast %103 : vector<1x16xf32> to vector<16xf32>
    %105 = vector.shape_cast %104 : vector<16xf32> to vector<16x1xf32>
    %106 = vector.extract_strided_slice %6 {offsets = [7, 0], sizes = [1, 20], strides = [1, 1]} : vector<8x20xi32> to vector<1x20xi32>
    %107 = vector.broadcast %106 : vector<1x20xi32> to vector<16x20xi32>
    %108 = arith.cmpi eq, %0, %107 : vector<16x20xi32>
    %cst_22 = arith.constant 0.000000e+00 : f32
    %109 = vector.shape_cast %105 : vector<16x1xf32> to vector<16x1xf32>
    %110 = vector.broadcast %109 : vector<16x1xf32> to vector<16x20xf32>
    %111 = vector.broadcast %cst_22 : f32 to vector<16x20xf32>
    %112 = arith.select %108, %110, %111 : vector<16x20xi1>, vector<16x20xf32>
    %cst_23 = arith.constant dense<0.000000e+00> : vector<20xf32>
    %113 = vector.multi_reduction <add>, %112, %cst_23 [0] : vector<16x20xf32> to vector<20xf32>
    %114 = vector.shape_cast %113 : vector<20xf32> to vector<1x20xf32>
    %115 = arith.addf %102, %114 : vector<1x20xf32>
    %cst_24 = arith.constant 0.000000e+00 : f32
    %116 = vector.broadcast %cst_24 : f32 to vector<1x20xf32>
    %117 = arith.cmpf ogt, %115, %116 : vector<1x20xf32>
    %cst_25 = arith.constant 1.000000e+00 : f32
    %118 = vector.broadcast %cst_25 : f32 to vector<1x20xf32>
    %119 = arith.select %117, %115, %118 : vector<1x20xi1>, vector<1x20xf32>
    %cst_26 = arith.constant 5.625000e+00 : f32
    %120 = vector.broadcast %cst_26 : f32 to vector<1x20xf32>
    %121 = arith.divf %120, %119 : vector<1x20xf32>
    %cst_27 = arith.constant 0.000000e+00 : f32
    %122 = vector.broadcast %cst_27 : f32 to vector<1x20xf32>
    %123 = arith.select %117, %121, %122 : vector<1x20xi1>, vector<1x20xf32>
    %cst_28 = arith.constant 5.000000e-01 : f32
    %124 = vector.broadcast %cst_28 : f32 to vector<1x20xf32>
    %125 = arith.addf %124, %123 : vector<1x20xf32>
    %126 = vector.shape_cast %125 : vector<1x20xf32> to vector<1x1x20xf32>
    %cst_29 = arith.constant dense<0x7F800000> : vector<1xf32>
    %127 = vector.multi_reduction <minimumf>, %126, %cst_29 [1, 2] : vector<1x1x20xf32> to vector<1xf32>
    %128 = vector.shape_cast %127 : vector<1xf32> to vector<1x1x1xf32>
    %129 = vector.extract %128[0, 0, 0] : f32 from vector<1x1x1xf32>
    %130 = vector.broadcast %129 : f32 to vector<1x20xf32>
    %131 = arith.cmpf oeq, %125, %130 : vector<1x20xf32>
    %c20_i32 = arith.constant 20 : i32
    %132 = vector.broadcast %c20_i32 : i32 to vector<1x20xi32>
    %133 = arith.select %131, %1, %132 : vector<1x20xi1>, vector<1x20xi32>
    %134 = vector.shape_cast %133 : vector<1x20xi32> to vector<1x1x20xi32>
    %cst_30 = arith.constant dense<2147483647> : vector<1xi32>
    %135 = vector.multi_reduction <minsi>, %134, %cst_30 [1, 2] : vector<1x1x20xi32> to vector<1xi32>
    %136 = vector.shape_cast %135 : vector<1xi32> to vector<1x1x1xi32>
    %137 = vector.extract %136[0, 0, 0] : i32 from vector<1x1x1xi32>
    %138 = vector.shape_cast %125 : vector<1x20xf32> to vector<1x1x20xf32>
    %cst_31 = arith.constant dense<0.000000e+00> : vector<1xf32>
    %139 = vector.multi_reduction <add>, %138, %cst_31 [1, 2] : vector<1x1x20xf32> to vector<1xf32>
    %140 = vector.shape_cast %139 : vector<1xf32> to vector<1x1x1xf32>
    %141 = vector.extract %140[0, 0, 0] : f32 from vector<1x1x1xf32>
    %142 = vector.broadcast %141 : f32 to vector<1x20xf32>
    %143 = arith.divf %125, %142 : vector<1x20xf32>
    %cst_32 = arith.constant 0.000000e+00 : f32
    %144 = vector.shape_cast %143 : vector<1x20xf32> to vector<1x20xf32>
    %145 = vector.broadcast %144 : vector<1x20xf32> to vector<20x20xf32>
    %146 = vector.broadcast %cst_32 : f32 to vector<20x20xf32>
    %147 = arith.select %4, %145, %146 : vector<20x20xi1>, vector<20x20xf32>
    %cst_33 = arith.constant dense<0.000000e+00> : vector<20xf32>
    %148 = vector.multi_reduction <add>, %147, %cst_33 [1] : vector<20x20xf32> to vector<20xf32>
    %149 = vector.shape_cast %148 : vector<20xf32> to vector<20x1xf32>
    %150 = vector.broadcast %149 : vector<20x1xf32> to vector<20x20xf32>
    %151 = vector.broadcast %10 : vector<1x20xf32> to vector<20x20xf32>
    %152 = arith.cmpf olt, %150, %151 : vector<20x20xf32>
    %153 = arith.extui %152 : vector<20x20xi1> to vector<20x20xi32>
    %154 = arith.sitofp %153 : vector<20x20xi32> to vector<20x20xf32>
    %cst_34 = arith.constant dense<0.000000e+00> : vector<20xf32>
    %155 = vector.multi_reduction <add>, %154, %cst_34 [0] : vector<20x20xf32> to vector<20xf32>
    %156 = vector.shape_cast %155 : vector<20xf32> to vector<1x20xf32>
    %cst_35 = arith.constant 1.900000e+01 : f32
    %157 = vector.broadcast %cst_35 : f32 to vector<1x20xf32>
    %158 = arith.minimumf %156, %157 : vector<1x20xf32>
    %c0_i32 = arith.constant 0 : i32
    %159 = vector.broadcast %c0_i32 : i32 to vector<1x20xi32>
    %160 = arith.cmpi eq, %1, %159 : vector<1x20xi32>
    %c1_i32 = arith.constant 1 : i32
    %161 = vector.broadcast %c1_i32 : i32 to vector<1x20xi32>
    %162 = arith.cmpi eq, %1, %161 : vector<1x20xi32>
    %163 = arith.sitofp %137 : i32 to f32
    %cst_36 = arith.constant 0.000000e+00 : f32
    %164 = vector.broadcast %163 : f32 to vector<1x20xf32>
    %165 = vector.broadcast %cst_36 : f32 to vector<1x20xf32>
    %166 = arith.select %162, %164, %165 : vector<1x20xi1>, vector<1x20xf32>
    %167 = vector.broadcast %129 : f32 to vector<1x20xf32>
    %168 = arith.select %160, %167, %166 : vector<1x20xi1>, vector<1x20xf32>
    %c0_37 = arith.constant 0 : index
    %c0_38 = arith.constant 0 : index
    %c0_39 = arith.constant 0 : index
    %169 = vector.load %arg4[%c0_37, %c0_38, %c0_39] : memref<4x8x128xf32, #tpu.memory_space<vmem>>, vector<1x1x20xf32>
    %170 = vector.shape_cast %169 : vector<1x1x20xf32> to vector<1x20xf32>
    %171 = vector.shape_cast %125 : vector<1x20xf32> to vector<1x1x20xf32>
    tpu.vector_store %arg4[%c0_37, %c0_38, %c0_39], %171 {strides = array<i32>} : memref<4x8x128xf32, #tpu.memory_space<vmem>>, vector<1x1x20xf32>,
    %c0_40 = arith.constant 0 : index
    %c1 = arith.constant 1 : index
    %c0_41 = arith.constant 0 : index
    %172 = vector.load %arg4[%c0_40, %c1, %c0_41] : memref<4x8x128xf32, #tpu.memory_space<vmem>>, vector<1x1x20xf32>
    %173 = vector.shape_cast %172 : vector<1x1x20xf32> to vector<1x20xf32>
    %174 = vector.shape_cast %158 : vector<1x20xf32> to vector<1x1x20xf32>
    tpu.vector_store %arg4[%c0_40, %c1, %c0_41], %174 {strides = array<i32>} : memref<4x8x128xf32, #tpu.memory_space<vmem>>, vector<1x1x20xf32>,
    %c0_42 = arith.constant 0 : index
    %c2 = arith.constant 2 : index
    %c0_43 = arith.constant 0 : index
    %175 = vector.load %arg4[%c0_42, %c2, %c0_43] : memref<4x8x128xf32, #tpu.memory_space<vmem>>, vector<1x1x20xf32>
    %176 = vector.shape_cast %175 : vector<1x1x20xf32> to vector<1x20xf32>
    %177 = vector.shape_cast %168 : vector<1x20xf32> to vector<1x1x20xf32>
    tpu.vector_store %arg4[%c0_42, %c2, %c0_43], %177 {strides = array<i32>} : memref<4x8x128xf32, #tpu.memory_space<vmem>>, vector<1x1x20xf32>,
    %c1_44 = arith.constant 1 : index
    %c0_45 = arith.constant 0 : index
    %c0_46 = arith.constant 0 : index
    %178 = vector.load %arg1[%c1_44, %c0_45, %c0_46] : memref<4x8x20xi32, #tpu.memory_space<vmem>>, vector<1x8x20xi32>
    %179 = vector.shape_cast %178 : vector<1x8x20xi32> to vector<8x20xi32>
    %c1_47 = arith.constant 1 : index
    %c0_48 = arith.constant 0 : index
    %c0_49 = arith.constant 0 : index
    %180 = vector.load %arg2[%c1_47, %c0_48, %c0_49] : memref<4x8x16xf32, #tpu.memory_space<vmem>>, vector<1x8x16xf32>
    %181 = vector.shape_cast %180 : vector<1x8x16xf32> to vector<8x16xf32>
    %c1_50 = arith.constant 1 : index
    %c0_51 = arith.constant 0 : index
    %c0_52 = arith.constant 0 : index
    %182 = vector.load %arg3[%c1_50, %c0_51, %c0_52] : memref<4x1x20xf32, #tpu.memory_space<vmem>>, vector<1x1x20xf32>
    %183 = vector.shape_cast %182 : vector<1x1x20xf32> to vector<1x20xf32>
    %cst_53 = arith.constant 0.000000e+00 : f32
    %184 = vector.broadcast %cst_53 : f32 to vector<1x20xf32>
    %185 = vector.extract_strided_slice %181 {offsets = [0, 0], sizes = [1, 16], strides = [1, 1]} : vector<8x16xf32> to vector<1x16xf32>
    %186 = vector.shape_cast %185 : vector<1x16xf32> to vector<16xf32>
    %187 = vector.shape_cast %186 : vector<16xf32> to vector<16x1xf32>
    %188 = vector.extract_strided_slice %179 {offsets = [0, 0], sizes = [1, 20], strides = [1, 1]} : vector<8x20xi32> to vector<1x20xi32>
    %189 = vector.broadcast %188 : vector<1x20xi32> to vector<16x20xi32>
    %190 = arith.cmpi eq, %0, %189 : vector<16x20xi32>
    %cst_54 = arith.constant 0.000000e+00 : f32
    %191 = vector.shape_cast %187 : vector<16x1xf32> to vector<16x1xf32>
    %192 = vector.broadcast %191 : vector<16x1xf32> to vector<16x20xf32>
    %193 = vector.broadcast %cst_54 : f32 to vector<16x20xf32>
    %194 = arith.select %190, %192, %193 : vector<16x20xi1>, vector<16x20xf32>
    %cst_55 = arith.constant dense<0.000000e+00> : vector<20xf32>
    %195 = vector.multi_reduction <add>, %194, %cst_55 [0] : vector<16x20xf32> to vector<20xf32>
    %196 = vector.shape_cast %195 : vector<20xf32> to vector<1x20xf32>
    %197 = arith.addf %184, %196 : vector<1x20xf32>
    %198 = vector.extract_strided_slice %181 {offsets = [1, 0], sizes = [1, 16], strides = [1, 1]} : vector<8x16xf32> to vector<1x16xf32>
    %199 = vector.shape_cast %198 : vector<1x16xf32> to vector<16xf32>
    %200 = vector.shape_cast %199 : vector<16xf32> to vector<16x1xf32>
    %201 = vector.extract_strided_slice %179 {offsets = [1, 0], sizes = [1, 20], strides = [1, 1]} : vector<8x20xi32> to vector<1x20xi32>
    %202 = vector.broadcast %201 : vector<1x20xi32> to vector<16x20xi32>
    %203 = arith.cmpi eq, %0, %202 : vector<16x20xi32>
    %cst_56 = arith.constant 0.000000e+00 : f32
    %204 = vector.shape_cast %200 : vector<16x1xf32> to vector<16x1xf32>
    %205 = vector.broadcast %204 : vector<16x1xf32> to vector<16x20xf32>
    %206 = vector.broadcast %cst_56 : f32 to vector<16x20xf32>
    %207 = arith.select %203, %205, %206 : vector<16x20xi1>, vector<16x20xf32>
    %cst_57 = arith.constant dense<0.000000e+00> : vector<20xf32>
    %208 = vector.multi_reduction <add>, %207, %cst_57 [0] : vector<16x20xf32> to vector<20xf32>
    %209 = vector.shape_cast %208 : vector<20xf32> to vector<1x20xf32>
    %210 = arith.addf %197, %209 : vector<1x20xf32>
    %211 = vector.extract_strided_slice %181 {offsets = [2, 0], sizes = [1, 16], strides = [1, 1]} : vector<8x16xf32> to vector<1x16xf32>
    %212 = vector.shape_cast %211 : vector<1x16xf32> to vector<16xf32>
    %213 = vector.shape_cast %212 : vector<16xf32> to vector<16x1xf32>
    %214 = vector.extract_strided_slice %179 {offsets = [2, 0], sizes = [1, 20], strides = [1, 1]} : vector<8x20xi32> to vector<1x20xi32>
    %215 = vector.broadcast %214 : vector<1x20xi32> to vector<16x20xi32>
    %216 = arith.cmpi eq, %0, %215 : vector<16x20xi32>
    %cst_58 = arith.constant 0.000000e+00 : f32
    %217 = vector.shape_cast %213 : vector<16x1xf32> to vector<16x1xf32>
    %218 = vector.broadcast %217 : vector<16x1xf32> to vector<16x20xf32>
    %219 = vector.broadcast %cst_58 : f32 to vector<16x20xf32>
    %220 = arith.select %216, %218, %219 : vector<16x20xi1>, vector<16x20xf32>
    %cst_59 = arith.constant dense<0.000000e+00> : vector<20xf32>
    %221 = vector.multi_reduction <add>, %220, %cst_59 [0] : vector<16x20xf32> to vector<20xf32>
    %222 = vector.shape_cast %221 : vector<20xf32> to vector<1x20xf32>
    %223 = arith.addf %210, %222 : vector<1x20xf32>
    %224 = vector.extract_strided_slice %181 {offsets = [3, 0], sizes = [1, 16], strides = [1, 1]} : vector<8x16xf32> to vector<1x16xf32>
    %225 = vector.shape_cast %224 : vector<1x16xf32> to vector<16xf32>
    %226 = vector.shape_cast %225 : vector<16xf32> to vector<16x1xf32>
    %227 = vector.extract_strided_slice %179 {offsets = [3, 0], sizes = [1, 20], strides = [1, 1]} : vector<8x20xi32> to vector<1x20xi32>
    %228 = vector.broadcast %227 : vector<1x20xi32> to vector<16x20xi32>
    %229 = arith.cmpi eq, %0, %228 : vector<16x20xi32>
    %cst_60 = arith.constant 0.000000e+00 : f32
    %230 = vector.shape_cast %226 : vector<16x1xf32> to vector<16x1xf32>
    %231 = vector.broadcast %230 : vector<16x1xf32> to vector<16x20xf32>
    %232 = vector.broadcast %cst_60 : f32 to vector<16x20xf32>
    %233 = arith.select %229, %231, %232 : vector<16x20xi1>, vector<16x20xf32>
    %cst_61 = arith.constant dense<0.000000e+00> : vector<20xf32>
    %234 = vector.multi_reduction <add>, %233, %cst_61 [0] : vector<16x20xf32> to vector<20xf32>
    %235 = vector.shape_cast %234 : vector<20xf32> to vector<1x20xf32>
    %236 = arith.addf %223, %235 : vector<1x20xf32>
    %237 = vector.extract_strided_slice %181 {offsets = [4, 0], sizes = [1, 16], strides = [1, 1]} : vector<8x16xf32> to vector<1x16xf32>
    %238 = vector.shape_cast %237 : vector<1x16xf32> to vector<16xf32>
    %239 = vector.shape_cast %238 : vector<16xf32> to vector<16x1xf32>
    %240 = vector.extract_strided_slice %179 {offsets = [4, 0], sizes = [1, 20], strides = [1, 1]} : vector<8x20xi32> to vector<1x20xi32>
    %241 = vector.broadcast %240 : vector<1x20xi32> to vector<16x20xi32>
    %242 = arith.cmpi eq, %0, %241 : vector<16x20xi32>
    %cst_62 = arith.constant 0.000000e+00 : f32
    %243 = vector.shape_cast %239 : vector<16x1xf32> to vector<16x1xf32>
    %244 = vector.broadcast %243 : vector<16x1xf32> to vector<16x20xf32>
    %245 = vector.broadcast %cst_62 : f32 to vector<16x20xf32>
    %246 = arith.select %242, %244, %245 : vector<16x20xi1>, vector<16x20xf32>
    %cst_63 = arith.constant dense<0.000000e+00> : vector<20xf32>
    %247 = vector.multi_reduction <add>, %246, %cst_63 [0] : vector<16x20xf32> to vector<20xf32>
    %248 = vector.shape_cast %247 : vector<20xf32> to vector<1x20xf32>
    %249 = arith.addf %236, %248 : vector<1x20xf32>
    %250 = vector.extract_strided_slice %181 {offsets = [5, 0], sizes = [1, 16], strides = [1, 1]} : vector<8x16xf32> to vector<1x16xf32>
    %251 = vector.shape_cast %250 : vector<1x16xf32> to vector<16xf32>
    %252 = vector.shape_cast %251 : vector<16xf32> to vector<16x1xf32>
    %253 = vector.extract_strided_slice %179 {offsets = [5, 0], sizes = [1, 20], strides = [1, 1]} : vector<8x20xi32> to vector<1x20xi32>
    %254 = vector.broadcast %253 : vector<1x20xi32> to vector<16x20xi32>
    %255 = arith.cmpi eq, %0, %254 : vector<16x20xi32>
    %cst_64 = arith.constant 0.000000e+00 : f32
    %256 = vector.shape_cast %252 : vector<16x1xf32> to vector<16x1xf32>
    %257 = vector.broadcast %256 : vector<16x1xf32> to vector<16x20xf32>
    %258 = vector.broadcast %cst_64 : f32 to vector<16x20xf32>
    %259 = arith.select %255, %257, %258 : vector<16x20xi1>, vector<16x20xf32>
    %cst_65 = arith.constant dense<0.000000e+00> : vector<20xf32>
    %260 = vector.multi_reduction <add>, %259, %cst_65 [0] : vector<16x20xf32> to vector<20xf32>
    %261 = vector.shape_cast %260 : vector<20xf32> to vector<1x20xf32>
    %262 = arith.addf %249, %261 : vector<1x20xf32>
    %263 = vector.extract_strided_slice %181 {offsets = [6, 0], sizes = [1, 16], strides = [1, 1]} : vector<8x16xf32> to vector<1x16xf32>
    %264 = vector.shape_cast %263 : vector<1x16xf32> to vector<16xf32>
    %265 = vector.shape_cast %264 : vector<16xf32> to vector<16x1xf32>
    %266 = vector.extract_strided_slice %179 {offsets = [6, 0], sizes = [1, 20], strides = [1, 1]} : vector<8x20xi32> to vector<1x20xi32>
    %267 = vector.broadcast %266 : vector<1x20xi32> to vector<16x20xi32>
    %268 = arith.cmpi eq, %0, %267 : vector<16x20xi32>
    %cst_66 = arith.constant 0.000000e+00 : f32
    %269 = vector.shape_cast %265 : vector<16x1xf32> to vector<16x1xf32>
    %270 = vector.broadcast %269 : vector<16x1xf32> to vector<16x20xf32>
    %271 = vector.broadcast %cst_66 : f32 to vector<16x20xf32>
    %272 = arith.select %268, %270, %271 : vector<16x20xi1>, vector<16x20xf32>
    %cst_67 = arith.constant dense<0.000000e+00> : vector<20xf32>
    %273 = vector.multi_reduction <add>, %272, %cst_67 [0] : vector<16x20xf32> to vector<20xf32>
    %274 = vector.shape_cast %273 : vector<20xf32> to vector<1x20xf32>
    %275 = arith.addf %262, %274 : vector<1x20xf32>
    %276 = vector.extract_strided_slice %181 {offsets = [7, 0], sizes = [1, 16], strides = [1, 1]} : vector<8x16xf32> to vector<1x16xf32>
    %277 = vector.shape_cast %276 : vector<1x16xf32> to vector<16xf32>
    %278 = vector.shape_cast %277 : vector<16xf32> to vector<16x1xf32>
    %279 = vector.extract_strided_slice %179 {offsets = [7, 0], sizes = [1, 20], strides = [1, 1]} : vector<8x20xi32> to vector<1x20xi32>
    %280 = vector.broadcast %279 : vector<1x20xi32> to vector<16x20xi32>
    %281 = arith.cmpi eq, %0, %280 : vector<16x20xi32>
    %cst_68 = arith.constant 0.000000e+00 : f32
    %282 = vector.shape_cast %278 : vector<16x1xf32> to vector<16x1xf32>
    %283 = vector.broadcast %282 : vector<16x1xf32> to vector<16x20xf32>
    %284 = vector.broadcast %cst_68 : f32 to vector<16x20xf32>
    %285 = arith.select %281, %283, %284 : vector<16x20xi1>, vector<16x20xf32>
    %cst_69 = arith.constant dense<0.000000e+00> : vector<20xf32>
    %286 = vector.multi_reduction <add>, %285, %cst_69 [0] : vector<16x20xf32> to vector<20xf32>
    %287 = vector.shape_cast %286 : vector<20xf32> to vector<1x20xf32>
    %288 = arith.addf %275, %287 : vector<1x20xf32>
    %cst_70 = arith.constant 0.000000e+00 : f32
    %289 = vector.broadcast %cst_70 : f32 to vector<1x20xf32>
    %290 = arith.cmpf ogt, %288, %289 : vector<1x20xf32>
    %cst_71 = arith.constant 1.000000e+00 : f32
    %291 = vector.broadcast %cst_71 : f32 to vector<1x20xf32>
    %292 = arith.select %290, %288, %291 : vector<1x20xi1>, vector<1x20xf32>
    %cst_72 = arith.constant 5.625000e+00 : f32
    %293 = vector.broadcast %cst_72 : f32 to vector<1x20xf32>
    %294 = arith.divf %293, %292 : vector<1x20xf32>
    %cst_73 = arith.constant 0.000000e+00 : f32
    %295 = vector.broadcast %cst_73 : f32 to vector<1x20xf32>
    %296 = arith.select %290, %294, %295 : vector<1x20xi1>, vector<1x20xf32>
    %cst_74 = arith.constant 5.000000e-01 : f32
    %297 = vector.broadcast %cst_74 : f32 to vector<1x20xf32>
    %298 = arith.addf %297, %296 : vector<1x20xf32>
    %299 = vector.shape_cast %298 : vector<1x20xf32> to vector<1x1x20xf32>
    %cst_75 = arith.constant dense<0x7F800000> : vector<1xf32>
    %300 = vector.multi_reduction <minimumf>, %299, %cst_75 [1, 2] : vector<1x1x20xf32> to vector<1xf32>
    %301 = vector.shape_cast %300 : vector<1xf32> to vector<1x1x1xf32>
    %302 = vector.extract %301[0, 0, 0] : f32 from vector<1x1x1xf32>
    %303 = vector.broadcast %302 : f32 to vector<1x20xf32>
    %304 = arith.cmpf oeq, %298, %303 : vector<1x20xf32>
    %c20_i32_76 = arith.constant 20 : i32
    %305 = vector.broadcast %c20_i32_76 : i32 to vector<1x20xi32>
    %306 = arith.select %304, %1, %305 : vector<1x20xi1>, vector<1x20xi32>
    %307 = vector.shape_cast %306 : vector<1x20xi32> to vector<1x1x20xi32>
    %cst_77 = arith.constant dense<2147483647> : vector<1xi32>
    %308 = vector.multi_reduction <minsi>, %307, %cst_77 [1, 2] : vector<1x1x20xi32> to vector<1xi32>
    %309 = vector.shape_cast %308 : vector<1xi32> to vector<1x1x1xi32>
    %310 = vector.extract %309[0, 0, 0] : i32 from vector<1x1x1xi32>
    %311 = vector.shape_cast %298 : vector<1x20xf32> to vector<1x1x20xf32>
    %cst_78 = arith.constant dense<0.000000e+00> : vector<1xf32>
    %312 = vector.multi_reduction <add>, %311, %cst_78 [1, 2] : vector<1x1x20xf32> to vector<1xf32>
    %313 = vector.shape_cast %312 : vector<1xf32> to vector<1x1x1xf32>
    %314 = vector.extract %313[0, 0, 0] : f32 from vector<1x1x1xf32>
    %315 = vector.broadcast %314 : f32 to vector<1x20xf32>
    %316 = arith.divf %298, %315 : vector<1x20xf32>
    %cst_79 = arith.constant 0.000000e+00 : f32
    %317 = vector.shape_cast %316 : vector<1x20xf32> to vector<1x20xf32>
    %318 = vector.broadcast %317 : vector<1x20xf32> to vector<20x20xf32>
    %319 = vector.broadcast %cst_79 : f32 to vector<20x20xf32>
    %320 = arith.select %4, %318, %319 : vector<20x20xi1>, vector<20x20xf32>
    %cst_80 = arith.constant dense<0.000000e+00> : vector<20xf32>
    %321 = vector.multi_reduction <add>, %320, %cst_80 [1] : vector<20x20xf32> to vector<20xf32>
    %322 = vector.shape_cast %321 : vector<20xf32> to vector<20x1xf32>
    %323 = vector.broadcast %322 : vector<20x1xf32> to vector<20x20xf32>
    %324 = vector.broadcast %183 : vector<1x20xf32> to vector<20x20xf32>
    %325 = arith.cmpf olt, %323, %324 : vector<20x20xf32>
    %326 = arith.extui %325 : vector<20x20xi1> to vector<20x20xi32>
    %327 = arith.sitofp %326 : vector<20x20xi32> to vector<20x20xf32>
    %cst_81 = arith.constant dense<0.000000e+00> : vector<20xf32>
    %328 = vector.multi_reduction <add>, %327, %cst_81 [0] : vector<20x20xf32> to vector<20xf32>
    %329 = vector.shape_cast %328 : vector<20xf32> to vector<1x20xf32>
    %cst_82 = arith.constant 1.900000e+01 : f32
    %330 = vector.broadcast %cst_82 : f32 to vector<1x20xf32>
    %331 = arith.minimumf %329, %330 : vector<1x20xf32>
    %c0_i32_83 = arith.constant 0 : i32
    %332 = vector.broadcast %c0_i32_83 : i32 to vector<1x20xi32>
    %333 = arith.cmpi eq, %1, %332 : vector<1x20xi32>
    %c1_i32_84 = arith.constant 1 : i32
    %334 = vector.broadcast %c1_i32_84 : i32 to vector<1x20xi32>
    %335 = arith.cmpi eq, %1, %334 : vector<1x20xi32>
    %336 = arith.sitofp %310 : i32 to f32
    %cst_85 = arith.constant 0.000000e+00 : f32
    %337 = vector.broadcast %336 : f32 to vector<1x20xf32>
    %338 = vector.broadcast %cst_85 : f32 to vector<1x20xf32>
    %339 = arith.select %335, %337, %338 : vector<1x20xi1>, vector<1x20xf32>
    %340 = vector.broadcast %302 : f32 to vector<1x20xf32>
    %341 = arith.select %333, %340, %339 : vector<1x20xi1>, vector<1x20xf32>
    %c1_86 = arith.constant 1 : index
    %c0_87 = arith.constant 0 : index
    %c0_88 = arith.constant 0 : index
    %342 = vector.load %arg4[%c1_86, %c0_87, %c0_88] : memref<4x8x128xf32, #tpu.memory_space<vmem>>, vector<1x1x20xf32>
    %343 = vector.shape_cast %342 : vector<1x1x20xf32> to vector<1x20xf32>
    %344 = vector.shape_cast %298 : vector<1x20xf32> to vector<1x1x20xf32>
    tpu.vector_store %arg4[%c1_86, %c0_87, %c0_88], %344 {strides = array<i32>} : memref<4x8x128xf32, #tpu.memory_space<vmem>>, vector<1x1x20xf32>,
    %c1_89 = arith.constant 1 : index
    %c1_90 = arith.constant 1 : index
    %c0_91 = arith.constant 0 : index
    %345 = vector.load %arg4[%c1_89, %c1_90, %c0_91] : memref<4x8x128xf32, #tpu.memory_space<vmem>>, vector<1x1x20xf32>
    %346 = vector.shape_cast %345 : vector<1x1x20xf32> to vector<1x20xf32>
    %347 = vector.shape_cast %331 : vector<1x20xf32> to vector<1x1x20xf32>
    tpu.vector_store %arg4[%c1_89, %c1_90, %c0_91], %347 {strides = array<i32>} : memref<4x8x128xf32, #tpu.memory_space<vmem>>, vector<1x1x20xf32>,
    %c1_92 = arith.constant 1 : index
    %c2_93 = arith.constant 2 : index
    %c0_94 = arith.constant 0 : index
    %348 = vector.load %arg4[%c1_92, %c2_93, %c0_94] : memref<4x8x128xf32, #tpu.memory_space<vmem>>, vector<1x1x20xf32>
    %349 = vector.shape_cast %348 : vector<1x1x20xf32> to vector<1x20xf32>
    %350 = vector.shape_cast %341 : vector<1x20xf32> to vector<1x1x20xf32>
    tpu.vector_store %arg4[%c1_92, %c2_93, %c0_94], %350 {strides = array<i32>} : memref<4x8x128xf32, #tpu.memory_space<vmem>>, vector<1x1x20xf32>,
    %c2_95 = arith.constant 2 : index
    %c0_96 = arith.constant 0 : index
    %c0_97 = arith.constant 0 : index
    %351 = vector.load %arg1[%c2_95, %c0_96, %c0_97] : memref<4x8x20xi32, #tpu.memory_space<vmem>>, vector<1x8x20xi32>
    %352 = vector.shape_cast %351 : vector<1x8x20xi32> to vector<8x20xi32>
    %c2_98 = arith.constant 2 : index
    %c0_99 = arith.constant 0 : index
    %c0_100 = arith.constant 0 : index
    %353 = vector.load %arg2[%c2_98, %c0_99, %c0_100] : memref<4x8x16xf32, #tpu.memory_space<vmem>>, vector<1x8x16xf32>
    %354 = vector.shape_cast %353 : vector<1x8x16xf32> to vector<8x16xf32>
    %c2_101 = arith.constant 2 : index
    %c0_102 = arith.constant 0 : index
    %c0_103 = arith.constant 0 : index
    %355 = vector.load %arg3[%c2_101, %c0_102, %c0_103] : memref<4x1x20xf32, #tpu.memory_space<vmem>>, vector<1x1x20xf32>
    %356 = vector.shape_cast %355 : vector<1x1x20xf32> to vector<1x20xf32>
    %cst_104 = arith.constant 0.000000e+00 : f32
    %357 = vector.broadcast %cst_104 : f32 to vector<1x20xf32>
    %358 = vector.extract_strided_slice %354 {offsets = [0, 0], sizes = [1, 16], strides = [1, 1]} : vector<8x16xf32> to vector<1x16xf32>
    %359 = vector.shape_cast %358 : vector<1x16xf32> to vector<16xf32>
    %360 = vector.shape_cast %359 : vector<16xf32> to vector<16x1xf32>
    %361 = vector.extract_strided_slice %352 {offsets = [0, 0], sizes = [1, 20], strides = [1, 1]} : vector<8x20xi32> to vector<1x20xi32>
    %362 = vector.broadcast %361 : vector<1x20xi32> to vector<16x20xi32>
    %363 = arith.cmpi eq, %0, %362 : vector<16x20xi32>
    %cst_105 = arith.constant 0.000000e+00 : f32
    %364 = vector.shape_cast %360 : vector<16x1xf32> to vector<16x1xf32>
    %365 = vector.broadcast %364 : vector<16x1xf32> to vector<16x20xf32>
    %366 = vector.broadcast %cst_105 : f32 to vector<16x20xf32>
    %367 = arith.select %363, %365, %366 : vector<16x20xi1>, vector<16x20xf32>
    %cst_106 = arith.constant dense<0.000000e+00> : vector<20xf32>
    %368 = vector.multi_reduction <add>, %367, %cst_106 [0] : vector<16x20xf32> to vector<20xf32>
    %369 = vector.shape_cast %368 : vector<20xf32> to vector<1x20xf32>
    %370 = arith.addf %357, %369 : vector<1x20xf32>
    %371 = vector.extract_strided_slice %354 {offsets = [1, 0], sizes = [1, 16], strides = [1, 1]} : vector<8x16xf32> to vector<1x16xf32>
    %372 = vector.shape_cast %371 : vector<1x16xf32> to vector<16xf32>
    %373 = vector.shape_cast %372 : vector<16xf32> to vector<16x1xf32>
    %374 = vector.extract_strided_slice %352 {offsets = [1, 0], sizes = [1, 20], strides = [1, 1]} : vector<8x20xi32> to vector<1x20xi32>
    %375 = vector.broadcast %374 : vector<1x20xi32> to vector<16x20xi32>
    %376 = arith.cmpi eq, %0, %375 : vector<16x20xi32>
    %cst_107 = arith.constant 0.000000e+00 : f32
    %377 = vector.shape_cast %373 : vector<16x1xf32> to vector<16x1xf32>
    %378 = vector.broadcast %377 : vector<16x1xf32> to vector<16x20xf32>
    %379 = vector.broadcast %cst_107 : f32 to vector<16x20xf32>
    %380 = arith.select %376, %378, %379 : vector<16x20xi1>, vector<16x20xf32>
    %cst_108 = arith.constant dense<0.000000e+00> : vector<20xf32>
    %381 = vector.multi_reduction <add>, %380, %cst_108 [0] : vector<16x20xf32> to vector<20xf32>
    %382 = vector.shape_cast %381 : vector<20xf32> to vector<1x20xf32>
    %383 = arith.addf %370, %382 : vector<1x20xf32>
    %384 = vector.extract_strided_slice %354 {offsets = [2, 0], sizes = [1, 16], strides = [1, 1]} : vector<8x16xf32> to vector<1x16xf32>
    %385 = vector.shape_cast %384 : vector<1x16xf32> to vector<16xf32>
    %386 = vector.shape_cast %385 : vector<16xf32> to vector<16x1xf32>
    %387 = vector.extract_strided_slice %352 {offsets = [2, 0], sizes = [1, 20], strides = [1, 1]} : vector<8x20xi32> to vector<1x20xi32>
    %388 = vector.broadcast %387 : vector<1x20xi32> to vector<16x20xi32>
    %389 = arith.cmpi eq, %0, %388 : vector<16x20xi32>
    %cst_109 = arith.constant 0.000000e+00 : f32
    %390 = vector.shape_cast %386 : vector<16x1xf32> to vector<16x1xf32>
    %391 = vector.broadcast %390 : vector<16x1xf32> to vector<16x20xf32>
    %392 = vector.broadcast %cst_109 : f32 to vector<16x20xf32>
    %393 = arith.select %389, %391, %392 : vector<16x20xi1>, vector<16x20xf32>
    %cst_110 = arith.constant dense<0.000000e+00> : vector<20xf32>
    %394 = vector.multi_reduction <add>, %393, %cst_110 [0] : vector<16x20xf32> to vector<20xf32>
    %395 = vector.shape_cast %394 : vector<20xf32> to vector<1x20xf32>
    %396 = arith.addf %383, %395 : vector<1x20xf32>
    %397 = vector.extract_strided_slice %354 {offsets = [3, 0], sizes = [1, 16], strides = [1, 1]} : vector<8x16xf32> to vector<1x16xf32>
    %398 = vector.shape_cast %397 : vector<1x16xf32> to vector<16xf32>
    %399 = vector.shape_cast %398 : vector<16xf32> to vector<16x1xf32>
    %400 = vector.extract_strided_slice %352 {offsets = [3, 0], sizes = [1, 20], strides = [1, 1]} : vector<8x20xi32> to vector<1x20xi32>
    %401 = vector.broadcast %400 : vector<1x20xi32> to vector<16x20xi32>
    %402 = arith.cmpi eq, %0, %401 : vector<16x20xi32>
    %cst_111 = arith.constant 0.000000e+00 : f32
    %403 = vector.shape_cast %399 : vector<16x1xf32> to vector<16x1xf32>
    %404 = vector.broadcast %403 : vector<16x1xf32> to vector<16x20xf32>
    %405 = vector.broadcast %cst_111 : f32 to vector<16x20xf32>
    %406 = arith.select %402, %404, %405 : vector<16x20xi1>, vector<16x20xf32>
    %cst_112 = arith.constant dense<0.000000e+00> : vector<20xf32>
    %407 = vector.multi_reduction <add>, %406, %cst_112 [0] : vector<16x20xf32> to vector<20xf32>
    %408 = vector.shape_cast %407 : vector<20xf32> to vector<1x20xf32>
    %409 = arith.addf %396, %408 : vector<1x20xf32>
    %410 = vector.extract_strided_slice %354 {offsets = [4, 0], sizes = [1, 16], strides = [1, 1]} : vector<8x16xf32> to vector<1x16xf32>
    %411 = vector.shape_cast %410 : vector<1x16xf32> to vector<16xf32>
    %412 = vector.shape_cast %411 : vector<16xf32> to vector<16x1xf32>
    %413 = vector.extract_strided_slice %352 {offsets = [4, 0], sizes = [1, 20], strides = [1, 1]} : vector<8x20xi32> to vector<1x20xi32>
    %414 = vector.broadcast %413 : vector<1x20xi32> to vector<16x20xi32>
    %415 = arith.cmpi eq, %0, %414 : vector<16x20xi32>
    %cst_113 = arith.constant 0.000000e+00 : f32
    %416 = vector.shape_cast %412 : vector<16x1xf32> to vector<16x1xf32>
    %417 = vector.broadcast %416 : vector<16x1xf32> to vector<16x20xf32>
    %418 = vector.broadcast %cst_113 : f32 to vector<16x20xf32>
    %419 = arith.select %415, %417, %418 : vector<16x20xi1>, vector<16x20xf32>
    %cst_114 = arith.constant dense<0.000000e+00> : vector<20xf32>
    %420 = vector.multi_reduction <add>, %419, %cst_114 [0] : vector<16x20xf32> to vector<20xf32>
    %421 = vector.shape_cast %420 : vector<20xf32> to vector<1x20xf32>
    %422 = arith.addf %409, %421 : vector<1x20xf32>
    %423 = vector.extract_strided_slice %354 {offsets = [5, 0], sizes = [1, 16], strides = [1, 1]} : vector<8x16xf32> to vector<1x16xf32>
    %424 = vector.shape_cast %423 : vector<1x16xf32> to vector<16xf32>
    %425 = vector.shape_cast %424 : vector<16xf32> to vector<16x1xf32>
    %426 = vector.extract_strided_slice %352 {offsets = [5, 0], sizes = [1, 20], strides = [1, 1]} : vector<8x20xi32> to vector<1x20xi32>
    %427 = vector.broadcast %426 : vector<1x20xi32> to vector<16x20xi32>
    %428 = arith.cmpi eq, %0, %427 : vector<16x20xi32>
    %cst_115 = arith.constant 0.000000e+00 : f32
    %429 = vector.shape_cast %425 : vector<16x1xf32> to vector<16x1xf32>
    %430 = vector.broadcast %429 : vector<16x1xf32> to vector<16x20xf32>
    %431 = vector.broadcast %cst_115 : f32 to vector<16x20xf32>
    %432 = arith.select %428, %430, %431 : vector<16x20xi1>, vector<16x20xf32>
    %cst_116 = arith.constant dense<0.000000e+00> : vector<20xf32>
    %433 = vector.multi_reduction <add>, %432, %cst_116 [0] : vector<16x20xf32> to vector<20xf32>
    %434 = vector.shape_cast %433 : vector<20xf32> to vector<1x20xf32>
    %435 = arith.addf %422, %434 : vector<1x20xf32>
    %436 = vector.extract_strided_slice %354 {offsets = [6, 0], sizes = [1, 16], strides = [1, 1]} : vector<8x16xf32> to vector<1x16xf32>
    %437 = vector.shape_cast %436 : vector<1x16xf32> to vector<16xf32>
    %438 = vector.shape_cast %437 : vector<16xf32> to vector<16x1xf32>
    %439 = vector.extract_strided_slice %352 {offsets = [6, 0], sizes = [1, 20], strides = [1, 1]} : vector<8x20xi32> to vector<1x20xi32>
    %440 = vector.broadcast %439 : vector<1x20xi32> to vector<16x20xi32>
    %441 = arith.cmpi eq, %0, %440 : vector<16x20xi32>
    %cst_117 = arith.constant 0.000000e+00 : f32
    %442 = vector.shape_cast %438 : vector<16x1xf32> to vector<16x1xf32>
    %443 = vector.broadcast %442 : vector<16x1xf32> to vector<16x20xf32>
    %444 = vector.broadcast %cst_117 : f32 to vector<16x20xf32>
    %445 = arith.select %441, %443, %444 : vector<16x20xi1>, vector<16x20xf32>
    %cst_118 = arith.constant dense<0.000000e+00> : vector<20xf32>
    %446 = vector.multi_reduction <add>, %445, %cst_118 [0] : vector<16x20xf32> to vector<20xf32>
    %447 = vector.shape_cast %446 : vector<20xf32> to vector<1x20xf32>
    %448 = arith.addf %435, %447 : vector<1x20xf32>
    %449 = vector.extract_strided_slice %354 {offsets = [7, 0], sizes = [1, 16], strides = [1, 1]} : vector<8x16xf32> to vector<1x16xf32>
    %450 = vector.shape_cast %449 : vector<1x16xf32> to vector<16xf32>
    %451 = vector.shape_cast %450 : vector<16xf32> to vector<16x1xf32>
    %452 = vector.extract_strided_slice %352 {offsets = [7, 0], sizes = [1, 20], strides = [1, 1]} : vector<8x20xi32> to vector<1x20xi32>
    %453 = vector.broadcast %452 : vector<1x20xi32> to vector<16x20xi32>
    %454 = arith.cmpi eq, %0, %453 : vector<16x20xi32>
    %cst_119 = arith.constant 0.000000e+00 : f32
    %455 = vector.shape_cast %451 : vector<16x1xf32> to vector<16x1xf32>
    %456 = vector.broadcast %455 : vector<16x1xf32> to vector<16x20xf32>
    %457 = vector.broadcast %cst_119 : f32 to vector<16x20xf32>
    %458 = arith.select %454, %456, %457 : vector<16x20xi1>, vector<16x20xf32>
    %cst_120 = arith.constant dense<0.000000e+00> : vector<20xf32>
    %459 = vector.multi_reduction <add>, %458, %cst_120 [0] : vector<16x20xf32> to vector<20xf32>
    %460 = vector.shape_cast %459 : vector<20xf32> to vector<1x20xf32>
    %461 = arith.addf %448, %460 : vector<1x20xf32>
    %cst_121 = arith.constant 0.000000e+00 : f32
    %462 = vector.broadcast %cst_121 : f32 to vector<1x20xf32>
    %463 = arith.cmpf ogt, %461, %462 : vector<1x20xf32>
    %cst_122 = arith.constant 1.000000e+00 : f32
    %464 = vector.broadcast %cst_122 : f32 to vector<1x20xf32>
    %465 = arith.select %463, %461, %464 : vector<1x20xi1>, vector<1x20xf32>
    %cst_123 = arith.constant 5.625000e+00 : f32
    %466 = vector.broadcast %cst_123 : f32 to vector<1x20xf32>
    %467 = arith.divf %466, %465 : vector<1x20xf32>
    %cst_124 = arith.constant 0.000000e+00 : f32
    %468 = vector.broadcast %cst_124 : f32 to vector<1x20xf32>
    %469 = arith.select %463, %467, %468 : vector<1x20xi1>, vector<1x20xf32>
    %cst_125 = arith.constant 5.000000e-01 : f32
    %470 = vector.broadcast %cst_125 : f32 to vector<1x20xf32>
    %471 = arith.addf %470, %469 : vector<1x20xf32>
    %472 = vector.shape_cast %471 : vector<1x20xf32> to vector<1x1x20xf32>
    %cst_126 = arith.constant dense<0x7F800000> : vector<1xf32>
    %473 = vector.multi_reduction <minimumf>, %472, %cst_126 [1, 2] : vector<1x1x20xf32> to vector<1xf32>
    %474 = vector.shape_cast %473 : vector<1xf32> to vector<1x1x1xf32>
    %475 = vector.extract %474[0, 0, 0] : f32 from vector<1x1x1xf32>
    %476 = vector.broadcast %475 : f32 to vector<1x20xf32>
    %477 = arith.cmpf oeq, %471, %476 : vector<1x20xf32>
    %c20_i32_127 = arith.constant 20 : i32
    %478 = vector.broadcast %c20_i32_127 : i32 to vector<1x20xi32>
    %479 = arith.select %477, %1, %478 : vector<1x20xi1>, vector<1x20xi32>
    %480 = vector.shape_cast %479 : vector<1x20xi32> to vector<1x1x20xi32>
    %cst_128 = arith.constant dense<2147483647> : vector<1xi32>
    %481 = vector.multi_reduction <minsi>, %480, %cst_128 [1, 2] : vector<1x1x20xi32> to vector<1xi32>
    %482 = vector.shape_cast %481 : vector<1xi32> to vector<1x1x1xi32>
    %483 = vector.extract %482[0, 0, 0] : i32 from vector<1x1x1xi32>
    %484 = vector.shape_cast %471 : vector<1x20xf32> to vector<1x1x20xf32>
    %cst_129 = arith.constant dense<0.000000e+00> : vector<1xf32>
    %485 = vector.multi_reduction <add>, %484, %cst_129 [1, 2] : vector<1x1x20xf32> to vector<1xf32>
    %486 = vector.shape_cast %485 : vector<1xf32> to vector<1x1x1xf32>
    %487 = vector.extract %486[0, 0, 0] : f32 from vector<1x1x1xf32>
    %488 = vector.broadcast %487 : f32 to vector<1x20xf32>
    %489 = arith.divf %471, %488 : vector<1x20xf32>
    %cst_130 = arith.constant 0.000000e+00 : f32
    %490 = vector.shape_cast %489 : vector<1x20xf32> to vector<1x20xf32>
    %491 = vector.broadcast %490 : vector<1x20xf32> to vector<20x20xf32>
    %492 = vector.broadcast %cst_130 : f32 to vector<20x20xf32>
    %493 = arith.select %4, %491, %492 : vector<20x20xi1>, vector<20x20xf32>
    %cst_131 = arith.constant dense<0.000000e+00> : vector<20xf32>
    %494 = vector.multi_reduction <add>, %493, %cst_131 [1] : vector<20x20xf32> to vector<20xf32>
    %495 = vector.shape_cast %494 : vector<20xf32> to vector<20x1xf32>
    %496 = vector.broadcast %495 : vector<20x1xf32> to vector<20x20xf32>
    %497 = vector.broadcast %356 : vector<1x20xf32> to vector<20x20xf32>
    %498 = arith.cmpf olt, %496, %497 : vector<20x20xf32>
    %499 = arith.extui %498 : vector<20x20xi1> to vector<20x20xi32>
    %500 = arith.sitofp %499 : vector<20x20xi32> to vector<20x20xf32>
    %cst_132 = arith.constant dense<0.000000e+00> : vector<20xf32>
    %501 = vector.multi_reduction <add>, %500, %cst_132 [0] : vector<20x20xf32> to vector<20xf32>
    %502 = vector.shape_cast %501 : vector<20xf32> to vector<1x20xf32>
    %cst_133 = arith.constant 1.900000e+01 : f32
    %503 = vector.broadcast %cst_133 : f32 to vector<1x20xf32>
    %504 = arith.minimumf %502, %503 : vector<1x20xf32>
    %c0_i32_134 = arith.constant 0 : i32
    %505 = vector.broadcast %c0_i32_134 : i32 to vector<1x20xi32>
    %506 = arith.cmpi eq, %1, %505 : vector<1x20xi32>
    %c1_i32_135 = arith.constant 1 : i32
    %507 = vector.broadcast %c1_i32_135 : i32 to vector<1x20xi32>
    %508 = arith.cmpi eq, %1, %507 : vector<1x20xi32>
    %509 = arith.sitofp %483 : i32 to f32
    %cst_136 = arith.constant 0.000000e+00 : f32
    %510 = vector.broadcast %509 : f32 to vector<1x20xf32>
    %511 = vector.broadcast %cst_136 : f32 to vector<1x20xf32>
    %512 = arith.select %508, %510, %511 : vector<1x20xi1>, vector<1x20xf32>
    %513 = vector.broadcast %475 : f32 to vector<1x20xf32>
    %514 = arith.select %506, %513, %512 : vector<1x20xi1>, vector<1x20xf32>
    %c2_137 = arith.constant 2 : index
    %c0_138 = arith.constant 0 : index
    %c0_139 = arith.constant 0 : index
    %515 = vector.load %arg4[%c2_137, %c0_138, %c0_139] : memref<4x8x128xf32, #tpu.memory_space<vmem>>, vector<1x1x20xf32>
    %516 = vector.shape_cast %515 : vector<1x1x20xf32> to vector<1x20xf32>
    %517 = vector.shape_cast %471 : vector<1x20xf32> to vector<1x1x20xf32>
    tpu.vector_store %arg4[%c2_137, %c0_138, %c0_139], %517 {strides = array<i32>} : memref<4x8x128xf32, #tpu.memory_space<vmem>>, vector<1x1x20xf32>,
    %c2_140 = arith.constant 2 : index
    %c1_141 = arith.constant 1 : index
    %c0_142 = arith.constant 0 : index
    %518 = vector.load %arg4[%c2_140, %c1_141, %c0_142] : memref<4x8x128xf32, #tpu.memory_space<vmem>>, vector<1x1x20xf32>
    %519 = vector.shape_cast %518 : vector<1x1x20xf32> to vector<1x20xf32>
    %520 = vector.shape_cast %504 : vector<1x20xf32> to vector<1x1x20xf32>
    tpu.vector_store %arg4[%c2_140, %c1_141, %c0_142], %520 {strides = array<i32>} : memref<4x8x128xf32, #tpu.memory_space<vmem>>, vector<1x1x20xf32>,
    %c2_143 = arith.constant 2 : index
    %c2_144 = arith.constant 2 : index
    %c0_145 = arith.constant 0 : index
    %521 = vector.load %arg4[%c2_143, %c2_144, %c0_145] : memref<4x8x128xf32, #tpu.memory_space<vmem>>, vector<1x1x20xf32>
    %522 = vector.shape_cast %521 : vector<1x1x20xf32> to vector<1x20xf32>
    %523 = vector.shape_cast %514 : vector<1x20xf32> to vector<1x1x20xf32>
    tpu.vector_store %arg4[%c2_143, %c2_144, %c0_145], %523 {strides = array<i32>} : memref<4x8x128xf32, #tpu.memory_space<vmem>>, vector<1x1x20xf32>,
    %c3 = arith.constant 3 : index
    %c0_146 = arith.constant 0 : index
    %c0_147 = arith.constant 0 : index
    %524 = vector.load %arg1[%c3, %c0_146, %c0_147] : memref<4x8x20xi32, #tpu.memory_space<vmem>>, vector<1x8x20xi32>
    %525 = vector.shape_cast %524 : vector<1x8x20xi32> to vector<8x20xi32>
    %c3_148 = arith.constant 3 : index
    %c0_149 = arith.constant 0 : index
    %c0_150 = arith.constant 0 : index
    %526 = vector.load %arg2[%c3_148, %c0_149, %c0_150] : memref<4x8x16xf32, #tpu.memory_space<vmem>>, vector<1x8x16xf32>
    %527 = vector.shape_cast %526 : vector<1x8x16xf32> to vector<8x16xf32>
    %c3_151 = arith.constant 3 : index
    %c0_152 = arith.constant 0 : index
    %c0_153 = arith.constant 0 : index
    %528 = vector.load %arg3[%c3_151, %c0_152, %c0_153] : memref<4x1x20xf32, #tpu.memory_space<vmem>>, vector<1x1x20xf32>
    %529 = vector.shape_cast %528 : vector<1x1x20xf32> to vector<1x20xf32>
    %cst_154 = arith.constant 0.000000e+00 : f32
    %530 = vector.broadcast %cst_154 : f32 to vector<1x20xf32>
    %531 = vector.extract_strided_slice %527 {offsets = [0, 0], sizes = [1, 16], strides = [1, 1]} : vector<8x16xf32> to vector<1x16xf32>
    %532 = vector.shape_cast %531 : vector<1x16xf32> to vector<16xf32>
    %533 = vector.shape_cast %532 : vector<16xf32> to vector<16x1xf32>
    %534 = vector.extract_strided_slice %525 {offsets = [0, 0], sizes = [1, 20], strides = [1, 1]} : vector<8x20xi32> to vector<1x20xi32>
    %535 = vector.broadcast %534 : vector<1x20xi32> to vector<16x20xi32>
    %536 = arith.cmpi eq, %0, %535 : vector<16x20xi32>
    %cst_155 = arith.constant 0.000000e+00 : f32
    %537 = vector.shape_cast %533 : vector<16x1xf32> to vector<16x1xf32>
    %538 = vector.broadcast %537 : vector<16x1xf32> to vector<16x20xf32>
    %539 = vector.broadcast %cst_155 : f32 to vector<16x20xf32>
    %540 = arith.select %536, %538, %539 : vector<16x20xi1>, vector<16x20xf32>
    %cst_156 = arith.constant dense<0.000000e+00> : vector<20xf32>
    %541 = vector.multi_reduction <add>, %540, %cst_156 [0] : vector<16x20xf32> to vector<20xf32>
    %542 = vector.shape_cast %541 : vector<20xf32> to vector<1x20xf32>
    %543 = arith.addf %530, %542 : vector<1x20xf32>
    %544 = vector.extract_strided_slice %527 {offsets = [1, 0], sizes = [1, 16], strides = [1, 1]} : vector<8x16xf32> to vector<1x16xf32>
    %545 = vector.shape_cast %544 : vector<1x16xf32> to vector<16xf32>
    %546 = vector.shape_cast %545 : vector<16xf32> to vector<16x1xf32>
    %547 = vector.extract_strided_slice %525 {offsets = [1, 0], sizes = [1, 20], strides = [1, 1]} : vector<8x20xi32> to vector<1x20xi32>
    %548 = vector.broadcast %547 : vector<1x20xi32> to vector<16x20xi32>
    %549 = arith.cmpi eq, %0, %548 : vector<16x20xi32>
    %cst_157 = arith.constant 0.000000e+00 : f32
    %550 = vector.shape_cast %546 : vector<16x1xf32> to vector<16x1xf32>
    %551 = vector.broadcast %550 : vector<16x1xf32> to vector<16x20xf32>
    %552 = vector.broadcast %cst_157 : f32 to vector<16x20xf32>
    %553 = arith.select %549, %551, %552 : vector<16x20xi1>, vector<16x20xf32>
    %cst_158 = arith.constant dense<0.000000e+00> : vector<20xf32>
    %554 = vector.multi_reduction <add>, %553, %cst_158 [0] : vector<16x20xf32> to vector<20xf32>
    %555 = vector.shape_cast %554 : vector<20xf32> to vector<1x20xf32>
    %556 = arith.addf %543, %555 : vector<1x20xf32>
    %557 = vector.extract_strided_slice %527 {offsets = [2, 0], sizes = [1, 16], strides = [1, 1]} : vector<8x16xf32> to vector<1x16xf32>
    %558 = vector.shape_cast %557 : vector<1x16xf32> to vector<16xf32>
    %559 = vector.shape_cast %558 : vector<16xf32> to vector<16x1xf32>
    %560 = vector.extract_strided_slice %525 {offsets = [2, 0], sizes = [1, 20], strides = [1, 1]} : vector<8x20xi32> to vector<1x20xi32>
    %561 = vector.broadcast %560 : vector<1x20xi32> to vector<16x20xi32>
    %562 = arith.cmpi eq, %0, %561 : vector<16x20xi32>
    %cst_159 = arith.constant 0.000000e+00 : f32
    %563 = vector.shape_cast %559 : vector<16x1xf32> to vector<16x1xf32>
    %564 = vector.broadcast %563 : vector<16x1xf32> to vector<16x20xf32>
    %565 = vector.broadcast %cst_159 : f32 to vector<16x20xf32>
    %566 = arith.select %562, %564, %565 : vector<16x20xi1>, vector<16x20xf32>
    %cst_160 = arith.constant dense<0.000000e+00> : vector<20xf32>
    %567 = vector.multi_reduction <add>, %566, %cst_160 [0] : vector<16x20xf32> to vector<20xf32>
    %568 = vector.shape_cast %567 : vector<20xf32> to vector<1x20xf32>
    %569 = arith.addf %556, %568 : vector<1x20xf32>
    %570 = vector.extract_strided_slice %527 {offsets = [3, 0], sizes = [1, 16], strides = [1, 1]} : vector<8x16xf32> to vector<1x16xf32>
    %571 = vector.shape_cast %570 : vector<1x16xf32> to vector<16xf32>
    %572 = vector.shape_cast %571 : vector<16xf32> to vector<16x1xf32>
    %573 = vector.extract_strided_slice %525 {offsets = [3, 0], sizes = [1, 20], strides = [1, 1]} : vector<8x20xi32> to vector<1x20xi32>
    %574 = vector.broadcast %573 : vector<1x20xi32> to vector<16x20xi32>
    %575 = arith.cmpi eq, %0, %574 : vector<16x20xi32>
    %cst_161 = arith.constant 0.000000e+00 : f32
    %576 = vector.shape_cast %572 : vector<16x1xf32> to vector<16x1xf32>
    %577 = vector.broadcast %576 : vector<16x1xf32> to vector<16x20xf32>
    %578 = vector.broadcast %cst_161 : f32 to vector<16x20xf32>
    %579 = arith.select %575, %577, %578 : vector<16x20xi1>, vector<16x20xf32>
    %cst_162 = arith.constant dense<0.000000e+00> : vector<20xf32>
    %580 = vector.multi_reduction <add>, %579, %cst_162 [0] : vector<16x20xf32> to vector<20xf32>
    %581 = vector.shape_cast %580 : vector<20xf32> to vector<1x20xf32>
    %582 = arith.addf %569, %581 : vector<1x20xf32>
    %583 = vector.extract_strided_slice %527 {offsets = [4, 0], sizes = [1, 16], strides = [1, 1]} : vector<8x16xf32> to vector<1x16xf32>
    %584 = vector.shape_cast %583 : vector<1x16xf32> to vector<16xf32>
    %585 = vector.shape_cast %584 : vector<16xf32> to vector<16x1xf32>
    %586 = vector.extract_strided_slice %525 {offsets = [4, 0], sizes = [1, 20], strides = [1, 1]} : vector<8x20xi32> to vector<1x20xi32>
    %587 = vector.broadcast %586 : vector<1x20xi32> to vector<16x20xi32>
    %588 = arith.cmpi eq, %0, %587 : vector<16x20xi32>
    %cst_163 = arith.constant 0.000000e+00 : f32
    %589 = vector.shape_cast %585 : vector<16x1xf32> to vector<16x1xf32>
    %590 = vector.broadcast %589 : vector<16x1xf32> to vector<16x20xf32>
    %591 = vector.broadcast %cst_163 : f32 to vector<16x20xf32>
    %592 = arith.select %588, %590, %591 : vector<16x20xi1>, vector<16x20xf32>
    %cst_164 = arith.constant dense<0.000000e+00> : vector<20xf32>
    %593 = vector.multi_reduction <add>, %592, %cst_164 [0] : vector<16x20xf32> to vector<20xf32>
    %594 = vector.shape_cast %593 : vector<20xf32> to vector<1x20xf32>
    %595 = arith.addf %582, %594 : vector<1x20xf32>
    %596 = vector.extract_strided_slice %527 {offsets = [5, 0], sizes = [1, 16], strides = [1, 1]} : vector<8x16xf32> to vector<1x16xf32>
    %597 = vector.shape_cast %596 : vector<1x16xf32> to vector<16xf32>
    %598 = vector.shape_cast %597 : vector<16xf32> to vector<16x1xf32>
    %599 = vector.extract_strided_slice %525 {offsets = [5, 0], sizes = [1, 20], strides = [1, 1]} : vector<8x20xi32> to vector<1x20xi32>
    %600 = vector.broadcast %599 : vector<1x20xi32> to vector<16x20xi32>
    %601 = arith.cmpi eq, %0, %600 : vector<16x20xi32>
    %cst_165 = arith.constant 0.000000e+00 : f32
    %602 = vector.shape_cast %598 : vector<16x1xf32> to vector<16x1xf32>
    %603 = vector.broadcast %602 : vector<16x1xf32> to vector<16x20xf32>
    %604 = vector.broadcast %cst_165 : f32 to vector<16x20xf32>
    %605 = arith.select %601, %603, %604 : vector<16x20xi1>, vector<16x20xf32>
    %cst_166 = arith.constant dense<0.000000e+00> : vector<20xf32>
    %606 = vector.multi_reduction <add>, %605, %cst_166 [0] : vector<16x20xf32> to vector<20xf32>
    %607 = vector.shape_cast %606 : vector<20xf32> to vector<1x20xf32>
    %608 = arith.addf %595, %607 : vector<1x20xf32>
    %609 = vector.extract_strided_slice %527 {offsets = [6, 0], sizes = [1, 16], strides = [1, 1]} : vector<8x16xf32> to vector<1x16xf32>
    %610 = vector.shape_cast %609 : vector<1x16xf32> to vector<16xf32>
    %611 = vector.shape_cast %610 : vector<16xf32> to vector<16x1xf32>
    %612 = vector.extract_strided_slice %525 {offsets = [6, 0], sizes = [1, 20], strides = [1, 1]} : vector<8x20xi32> to vector<1x20xi32>
    %613 = vector.broadcast %612 : vector<1x20xi32> to vector<16x20xi32>
    %614 = arith.cmpi eq, %0, %613 : vector<16x20xi32>
    %cst_167 = arith.constant 0.000000e+00 : f32
    %615 = vector.shape_cast %611 : vector<16x1xf32> to vector<16x1xf32>
    %616 = vector.broadcast %615 : vector<16x1xf32> to vector<16x20xf32>
    %617 = vector.broadcast %cst_167 : f32 to vector<16x20xf32>
    %618 = arith.select %614, %616, %617 : vector<16x20xi1>, vector<16x20xf32>
    %cst_168 = arith.constant dense<0.000000e+00> : vector<20xf32>
    %619 = vector.multi_reduction <add>, %618, %cst_168 [0] : vector<16x20xf32> to vector<20xf32>
    %620 = vector.shape_cast %619 : vector<20xf32> to vector<1x20xf32>
    %621 = arith.addf %608, %620 : vector<1x20xf32>
    %622 = vector.extract_strided_slice %527 {offsets = [7, 0], sizes = [1, 16], strides = [1, 1]} : vector<8x16xf32> to vector<1x16xf32>
    %623 = vector.shape_cast %622 : vector<1x16xf32> to vector<16xf32>
    %624 = vector.shape_cast %623 : vector<16xf32> to vector<16x1xf32>
    %625 = vector.extract_strided_slice %525 {offsets = [7, 0], sizes = [1, 20], strides = [1, 1]} : vector<8x20xi32> to vector<1x20xi32>
    %626 = vector.broadcast %625 : vector<1x20xi32> to vector<16x20xi32>
    %627 = arith.cmpi eq, %0, %626 : vector<16x20xi32>
    %cst_169 = arith.constant 0.000000e+00 : f32
    %628 = vector.shape_cast %624 : vector<16x1xf32> to vector<16x1xf32>
    %629 = vector.broadcast %628 : vector<16x1xf32> to vector<16x20xf32>
    %630 = vector.broadcast %cst_169 : f32 to vector<16x20xf32>
    %631 = arith.select %627, %629, %630 : vector<16x20xi1>, vector<16x20xf32>
    %cst_170 = arith.constant dense<0.000000e+00> : vector<20xf32>
    %632 = vector.multi_reduction <add>, %631, %cst_170 [0] : vector<16x20xf32> to vector<20xf32>
    %633 = vector.shape_cast %632 : vector<20xf32> to vector<1x20xf32>
    %634 = arith.addf %621, %633 : vector<1x20xf32>
    %cst_171 = arith.constant 0.000000e+00 : f32
    %635 = vector.broadcast %cst_171 : f32 to vector<1x20xf32>
    %636 = arith.cmpf ogt, %634, %635 : vector<1x20xf32>
    %cst_172 = arith.constant 1.000000e+00 : f32
    %637 = vector.broadcast %cst_172 : f32 to vector<1x20xf32>
    %638 = arith.select %636, %634, %637 : vector<1x20xi1>, vector<1x20xf32>
    %cst_173 = arith.constant 5.625000e+00 : f32
    %639 = vector.broadcast %cst_173 : f32 to vector<1x20xf32>
    %640 = arith.divf %639, %638 : vector<1x20xf32>
    %cst_174 = arith.constant 0.000000e+00 : f32
    %641 = vector.broadcast %cst_174 : f32 to vector<1x20xf32>
    %642 = arith.select %636, %640, %641 : vector<1x20xi1>, vector<1x20xf32>
    %cst_175 = arith.constant 5.000000e-01 : f32
    %643 = vector.broadcast %cst_175 : f32 to vector<1x20xf32>
    %644 = arith.addf %643, %642 : vector<1x20xf32>
    %645 = vector.shape_cast %644 : vector<1x20xf32> to vector<1x1x20xf32>
    %cst_176 = arith.constant dense<0x7F800000> : vector<1xf32>
    %646 = vector.multi_reduction <minimumf>, %645, %cst_176 [1, 2] : vector<1x1x20xf32> to vector<1xf32>
    %647 = vector.shape_cast %646 : vector<1xf32> to vector<1x1x1xf32>
    %648 = vector.extract %647[0, 0, 0] : f32 from vector<1x1x1xf32>
    %649 = vector.broadcast %648 : f32 to vector<1x20xf32>
    %650 = arith.cmpf oeq, %644, %649 : vector<1x20xf32>
    %c20_i32_177 = arith.constant 20 : i32
    %651 = vector.broadcast %c20_i32_177 : i32 to vector<1x20xi32>
    %652 = arith.select %650, %1, %651 : vector<1x20xi1>, vector<1x20xi32>
    %653 = vector.shape_cast %652 : vector<1x20xi32> to vector<1x1x20xi32>
    %cst_178 = arith.constant dense<2147483647> : vector<1xi32>
    %654 = vector.multi_reduction <minsi>, %653, %cst_178 [1, 2] : vector<1x1x20xi32> to vector<1xi32>
    %655 = vector.shape_cast %654 : vector<1xi32> to vector<1x1x1xi32>
    %656 = vector.extract %655[0, 0, 0] : i32 from vector<1x1x1xi32>
    %657 = vector.shape_cast %644 : vector<1x20xf32> to vector<1x1x20xf32>
    %cst_179 = arith.constant dense<0.000000e+00> : vector<1xf32>
    %658 = vector.multi_reduction <add>, %657, %cst_179 [1, 2] : vector<1x1x20xf32> to vector<1xf32>
    %659 = vector.shape_cast %658 : vector<1xf32> to vector<1x1x1xf32>
    %660 = vector.extract %659[0, 0, 0] : f32 from vector<1x1x1xf32>
    %661 = vector.broadcast %660 : f32 to vector<1x20xf32>
    %662 = arith.divf %644, %661 : vector<1x20xf32>
    %cst_180 = arith.constant 0.000000e+00 : f32
    %663 = vector.shape_cast %662 : vector<1x20xf32> to vector<1x20xf32>
    %664 = vector.broadcast %663 : vector<1x20xf32> to vector<20x20xf32>
    %665 = vector.broadcast %cst_180 : f32 to vector<20x20xf32>
    %666 = arith.select %4, %664, %665 : vector<20x20xi1>, vector<20x20xf32>
    %cst_181 = arith.constant dense<0.000000e+00> : vector<20xf32>
    %667 = vector.multi_reduction <add>, %666, %cst_181 [1] : vector<20x20xf32> to vector<20xf32>
    %668 = vector.shape_cast %667 : vector<20xf32> to vector<20x1xf32>
    %669 = vector.broadcast %668 : vector<20x1xf32> to vector<20x20xf32>
    %670 = vector.broadcast %529 : vector<1x20xf32> to vector<20x20xf32>
    %671 = arith.cmpf olt, %669, %670 : vector<20x20xf32>
    %672 = arith.extui %671 : vector<20x20xi1> to vector<20x20xi32>
    %673 = arith.sitofp %672 : vector<20x20xi32> to vector<20x20xf32>
    %cst_182 = arith.constant dense<0.000000e+00> : vector<20xf32>
    %674 = vector.multi_reduction <add>, %673, %cst_182 [0] : vector<20x20xf32> to vector<20xf32>
    %675 = vector.shape_cast %674 : vector<20xf32> to vector<1x20xf32>
    %cst_183 = arith.constant 1.900000e+01 : f32
    %676 = vector.broadcast %cst_183 : f32 to vector<1x20xf32>
    %677 = arith.minimumf %675, %676 : vector<1x20xf32>
    %c0_i32_184 = arith.constant 0 : i32
    %678 = vector.broadcast %c0_i32_184 : i32 to vector<1x20xi32>
    %679 = arith.cmpi eq, %1, %678 : vector<1x20xi32>
    %c1_i32_185 = arith.constant 1 : i32
    %680 = vector.broadcast %c1_i32_185 : i32 to vector<1x20xi32>
    %681 = arith.cmpi eq, %1, %680 : vector<1x20xi32>
    %682 = arith.sitofp %656 : i32 to f32
    %cst_186 = arith.constant 0.000000e+00 : f32
    %683 = vector.broadcast %682 : f32 to vector<1x20xf32>
    %684 = vector.broadcast %cst_186 : f32 to vector<1x20xf32>
    %685 = arith.select %681, %683, %684 : vector<1x20xi1>, vector<1x20xf32>
    %686 = vector.broadcast %648 : f32 to vector<1x20xf32>
    %687 = arith.select %679, %686, %685 : vector<1x20xi1>, vector<1x20xf32>
    %c3_187 = arith.constant 3 : index
    %c0_188 = arith.constant 0 : index
    %c0_189 = arith.constant 0 : index
    %688 = vector.load %arg4[%c3_187, %c0_188, %c0_189] : memref<4x8x128xf32, #tpu.memory_space<vmem>>, vector<1x1x20xf32>
    %689 = vector.shape_cast %688 : vector<1x1x20xf32> to vector<1x20xf32>
    %690 = vector.shape_cast %644 : vector<1x20xf32> to vector<1x1x20xf32>
    tpu.vector_store %arg4[%c3_187, %c0_188, %c0_189], %690 {strides = array<i32>} : memref<4x8x128xf32, #tpu.memory_space<vmem>>, vector<1x1x20xf32>,
    %c3_190 = arith.constant 3 : index
    %c1_191 = arith.constant 1 : index
    %c0_192 = arith.constant 0 : index
    %691 = vector.load %arg4[%c3_190, %c1_191, %c0_192] : memref<4x8x128xf32, #tpu.memory_space<vmem>>, vector<1x1x20xf32>
    %692 = vector.shape_cast %691 : vector<1x1x20xf32> to vector<1x20xf32>
    %693 = vector.shape_cast %677 : vector<1x20xf32> to vector<1x1x20xf32>
    tpu.vector_store %arg4[%c3_190, %c1_191, %c0_192], %693 {strides = array<i32>} : memref<4x8x128xf32, #tpu.memory_space<vmem>>, vector<1x1x20xf32>,
    %c3_193 = arith.constant 3 : index
    %c2_194 = arith.constant 2 : index
    %c0_195 = arith.constant 0 : index
    %694 = vector.load %arg4[%c3_193, %c2_194, %c0_195] : memref<4x8x128xf32, #tpu.memory_space<vmem>>, vector<1x1x20xf32>
    %695 = vector.shape_cast %694 : vector<1x1x20xf32> to vector<1x20xf32>
    %696 = vector.shape_cast %687 : vector<1x20xf32> to vector<1x1x20xf32>
    tpu.vector_store %arg4[%c3_193, %c2_194, %c0_195], %696 {strides = array<i32>} : memref<4x8x128xf32, #tpu.memory_space<vmem>>, vector<1x1x20xf32>,
    return
  }
  func.func @transform_0(%arg0: i32) -> (i32, i32, i32) {
    %c0_i32 = arith.constant 0 : i32
    %c0_i32_0 = arith.constant 0 : i32
    %c0_i32_1 = arith.constant 0 : i32
    return %arg0, %c0_i32, %c0_i32_0 : i32, i32, i32
  }
  func.func @transform_1(%arg0: i32) -> (i32, i32, i32) {
    %c0_i32 = arith.constant 0 : i32
    %c0_i32_0 = arith.constant 0 : i32
    %c0_i32_1 = arith.constant 0 : i32
    return %arg0, %c0_i32, %c0_i32_0 : i32, i32, i32
  }
  func.func @transform_2(%arg0: i32) -> (i32, i32, i32) {
    %c0_i32 = arith.constant 0 : i32
    %c0_i32_0 = arith.constant 0 : i32
    %c0_i32_1 = arith.constant 0 : i32
    return %arg0, %c0_i32, %c0_i32_0 : i32, i32, i32
  }
  func.func @transform_3(%arg0: i32) -> (i32, i32, i32) {
    %c0_i32 = arith.constant 0 : i32
    %c0_i32_0 = arith.constant 0 : i32
    %c0_i32_1 = arith.constant 0 : i32
    return %arg0, %c0_i32, %c0_i32_0 : i32, i32, i32
  }
}

</mosaic_0001>

<llo_original>
// kernel: tpu_custom_call.1
$region0: #{tpu_custom_call.1}
  #allocation0 [shape = 'u32[]', space=smem, size = 0x4, offset = 0x4, fixed_abs, tag = 'smem constant byte address 0x4 - core index']
  #allocation1 [shape = 'u32[144,128]{1,0:T(1,128)}', space=vmem, size = 0x12000, scoped, tag = 'internal scratch']
  %s0 = inlined_call_operand.hbm [shape: s32[8,8,20], index: 0, kind: input, shape index: {}]
  %s1 = inlined_call_operand.hbm [shape: f32[8,8,16], index: 1, kind: input, shape index: {}]
  %s2 = inlined_call_operand.hbm [shape: f32[8,1,20], index: 2, kind: input, shape index: {}]
  %s3 = inlined_call_operand.hbm [shape: f32[8,8,128], index: 3, kind: output, shape index: {}]
  %s4 = sld [smem:[#allocation0]]
  $region57: #{tpu_custom_call.1} parent=0
    _
  %s6 = ssub.s32 1, %s4
  %s7 = scalar_select 0, %s6, %s4
  $region1: #{tpu_custom_call.1} parent=0
    #allocation2 [shape = 'u8[32768]{0}', space=vmem, size = 0x8000, scoped, tag = 'input window, operand 0']
    #allocation3 [shape = 's32[2]{0}', space=sflag, size = 0x8, scoped, tag = 'scoped memory for tpu_custom_call.1']
    #allocation4 [shape = 's32[2]{0}', space=sflag, size = 0x8, scoped, tag = 'scoped memory for tpu_custom_call.1']
    #allocation5 [shape = 'u8[32768]{0}', space=vmem, size = 0x8000, scoped, tag = 'input window, operand 1']
    #allocation6 [shape = 's32[2]{0}', space=sflag, size = 0x8, scoped, tag = 'scoped memory for tpu_custom_call.1']
    #allocation7 [shape = 'u8[4096]{0}', space=vmem, size = 0x1000, scoped, tag = 'input window, operand 2']
    #allocation8 [shape = 'u8[32768]{0}', space=vmem, size = 0x8000, scoped, tag = 'output window, operand 0']
    %8 = vsyncpa [#allocation3], 0
    %s9 = scalar_lea.sflag [#allocation3], 1
    %10 = vsyncpa %s9, 0
    %11 = vsyncpa [#allocation6], 0
    %s12 = scalar_lea.sflag [#allocation6], 1
    %13 = vsyncpa %s12, 0
    %14 = vsyncpa [#allocation4], 0
    %s15 = scalar_lea.sflag [#allocation4], 1
    %16 = vsyncpa %s15, 0
    loop: start=0, step=1, limit=4
    $region2: #{tpu_custom_call.1} parent=1 // loop_pre_header
      _
    $region3: #{tpu_custom_call.1} parent=1 // loop_header
      %s18 = sphi 0, %s22
      %p19 = scmp.ge.s32.totalorder %s18, 4
      %s28 = sphi 0, %s30
      %s31 = sphi 0, %s28
      %s32 = sphi 0, %s31
      %s48 = sphi 0, %s32
      %s54 = sphi 0, %s56
      %s57 = sphi 0, %s54
      %s58 = sphi 0, %s57
      %s74 = sphi 0, %s58
      %s80 = sphi 0, %s82
      %s83 = sphi 0, %s80
      %s84 = sphi 0, %s83
      %s100 = sphi 0, %s84
      %s106 = sphi 0, %s108
      %s109 = sphi 0, %s106
      %s110 = sphi 0, %s109
      %s126 = sphi 0, %s110
    $region4: #{tpu_custom_call.1} parent=1 // loop_header_branch
      %21 = sbr.rel (%p19) target = $region8
    $region5: #{tpu_custom_call.1} parent=1 // loop_body
      %s23 = ssub.s32 %s18, 1
      %s24 = ssub.s32 %s18, 2
      %s25 = sadd.s32 %s18, 1
      %s26 = ssub.s32 %s18, %s25
      %p27 = scmp.eq.s32.totalorder %s26, 0
      %s29 = sadd.s32 %s28, 1
      %s30 = scalar_select %p27, %s28, %s29
      %p33 = pneg %p27
      %p34 = scmp.eq.s32.totalorder %s18, 1
      %p35 = por %p33, %p34
      %p36 = scmp.ne.s32.totalorder %s28, %s31
      %p37 = scmp.eq.s32.totalorder %s18, 0
      %p38 = por %p36, %p37
      %p39 = scmp.ne.s32.totalorder %s28, %s31
      %p40 = scmp.eq.s32.totalorder %s23, 1
      %p41 = por %p39, %p40
      %p42 = scmp.ne.s32.totalorder %s31, %s32
      %p43 = scmp.eq.s32.totalorder %s23, 0
      %p44 = por %p42, %p43
      %p45 = scmp.ne.s32.totalorder %s31, %s32
      %p46 = scmp.eq.s32.totalorder %s24, 1
      %p47 = por %p45, %p46
      %p49 = scmp.ne.s32.totalorder %s32, %s48
      %p50 = scmp.eq.s32.totalorder %s24, 0
      %p51 = por %p49, %p50
      %s52 = ssub.s32 %s18, %s25
      %p53 = scmp.eq.s32.totalorder %s52, 0
      %s55 = sadd.s32 %s54, 1
      %s56 = scalar_select %p53, %s54, %s55
      %p59 = pneg %p53
      %p60 = scmp.eq.s32.totalorder %s18, 1
      %p61 = por %p59, %p60
      %p62 = scmp.ne.s32.totalorder %s54, %s57
      %p63 = scmp.eq.s32.totalorder %s18, 0
      %p64 = por %p62, %p63
      %p65 = scmp.ne.s32.totalorder %s54, %s57
      %p66 = scmp.eq.s32.totalorder %s23, 1
      %p67 = por %p65, %p66
      %p68 = scmp.ne.s32.totalorder %s57, %s58
      %p69 = scmp.eq.s32.totalorder %s23, 0
      %p70 = por %p68, %p69
      %p71 = scmp.ne.s32.totalorder %s57, %s58
      %p72 = scmp.eq.s32.totalorder %s24, 1
      %p73 = por %p71, %p72
      %p75 = scmp.ne.s32.totalorder %s58, %s74
      %p76 = scmp.eq.s32.totalorder %s24, 0
      %p77 = por %p75, %p76
      %s78 = ssub.s32 %s18, %s25
      %p79 = scmp.eq.s32.totalorder %s78, 0
      %s81 = sadd.s32 %s80, 1
      %s82 = scalar_select %p79, %s80, %s81
      %p85 = pneg %p79
      %p86 = scmp.eq.s32.totalorder %s18, 1
      %p87 = por %p85, %p86
      %p88 = scmp.ne.s32.totalorder %s80, %s83
      %p89 = scmp.eq.s32.totalorder %s18, 0
      %p90 = por %p88, %p89
      %p91 = scmp.ne.s32.totalorder %s80, %s83
      %p92 = scmp.eq.s32.totalorder %s23, 1
      %p93 = por %p91, %p92
      %p94 = scmp.ne.s32.totalorder %s83, %s84
      %p95 = scmp.eq.s32.totalorder %s23, 0
      %p96 = por %p94, %p95
      %p97 = scmp.ne.s32.totalorder %s83, %s84
      %p98 = scmp.eq.s32.totalorder %s24, 1
      %p99 = por %p97, %p98
      %p101 = scmp.ne.s32.totalorder %s84, %s100
      %p102 = scmp.eq.s32.totalorder %s24, 0
      %p103 = por %p101, %p102
      %s104 = ssub.s32 %s18, %s25
      %p105 = scmp.eq.s32.totalorder %s104, 0
      %s107 = sadd.s32 %s106, 1
      %s108 = scalar_select %p105, %s106, %s107
      %p111 = pneg %p105
      %p112 = scmp.eq.s32.totalorder %s18, 1
      %p113 = por %p111, %p112
      %p114 = scmp.ne.s32.totalorder %s106, %s109
      %p115 = scmp.eq.s32.totalorder %s18, 0
      %p116 = por %p114, %p115
      %p117 = scmp.ne.s32.totalorder %s106, %s109
      %p118 = scmp.eq.s32.totalorder %s23, 1
      %p119 = por %p117, %p118
      %p120 = scmp.ne.s32.totalorder %s109, %s110
      %p121 = scmp.eq.s32.totalorder %s23, 0
      %p122 = por %p120, %p121
      %p123 = scmp.ne.s32.totalorder %s109, %s110
      %p124 = scmp.eq.s32.totalorder %s24, 1
      %p125 = por %p123, %p124
      %p127 = scmp.ne.s32.totalorder %s110, %s126
      %p128 = scmp.eq.s32.totalorder %s24, 0
      %p129 = por %p127, %p128
      %p130 = scmp.le.s32.totalorder 1, %s18
      %p131 = scmp.lt.s32.totalorder %s18, 3
      %p132 = pnand %p130, %p131
      %p133 = pneg %p132
      // Predicated region
      $region9: #{tpu_custom_call.1} parent=5 // pred_check
        _
      $region10: #{tpu_custom_call.1} parent=5 // pred_check_branch
        %135 = sbr.rel (%p132) target = $region12
      $region11: #{tpu_custom_call.1} parent=5 // pred_region
        %s136 = ssub.s32 %s18, 1
      $region12: #{tpu_custom_call.1} parent=5 // pred_fallthru
        _
      %p137 = scmp.lt.s32.totalorder %s18, 2
      // Predicated region
      $region13: #{tpu_custom_call.1} parent=5 // pred_check
        %p138 = pneg %p137
      $region14: #{tpu_custom_call.1} parent=5 // pred_check_branch
        %140 = sbr.rel (%p138) target = $region16
      $region15: #{tpu_custom_call.1} parent=5 // pred_region
        // Predicated region
        $region17: #{tpu_custom_call.1} parent=15 // pred_check
          %p141 = pneg %p38
        $region18: #{tpu_custom_call.1} parent=15 // pred_check_branch
          %143 = sbr.rel (%p141) target = $region20
        $region19: #{tpu_custom_call.1} parent=15 // pred_region
          %s144 = sand.u32 %s28, 1
          %s145 = scalar_lea.sflag [#allocation3], %s144
          %s146 = sand.u32 %s28, 1
          %s147 = smul.addr %s146, 32
          %s148 = scalar_lea.vmem [#allocation2], %s147
          %s149 = smul.u32 4, %s18
          %s151 = ssub.s32 512, 512
          %152 = vsyncadd %s145, %s151
          %s153 = smul.addr %s149, 128
          %s154 = scalar_lea.hbm %s0, %s153
          %s155 = sshll.u32 %s148, 4
          %s156 = int_to_ptr.vmem [resolvable:$true] %s155
          %161 = dma.hbm_to_vmem [thread:$0]  %s154, 512, %s156, %s145, 128, 128, 8
        $region20: #{tpu_custom_call.1} parent=15 // pred_fallthru
          _
        // Predicated region
        $region21: #{tpu_custom_call.1} parent=15 // pred_check
          %p162 = pneg %p64
        $region22: #{tpu_custom_call.1} parent=15 // pred_check_branch
          %164 = sbr.rel (%p162) target = $region24
        $region23: #{tpu_custom_call.1} parent=15 // pred_region
          %s165 = sand.u32 %s18, 1
          %s166 = scalar_lea.sflag [#allocation6], %s165
          %s167 = sand.u32 %s54, 1
          %s168 = smul.addr %s167, 32
          %s169 = scalar_lea.vmem [#allocation5], %s168
          %s170 = smul.u32 4, %s18
          %s172 = ssub.s32 512, 512
          %173 = vsyncadd %s166, %s172
          %s174 = smul.addr %s170, 128
          %s175 = scalar_lea.hbm %s1, %s174
          %s176 = sshll.u32 %s169, 4
          %s177 = int_to_ptr.vmem [resolvable:$true] %s176
          %182 = dma.hbm_to_vmem [thread:$0]  %s175, 512, %s177, %s166, 128, 128, 8
        $region24: #{tpu_custom_call.1} parent=15 // pred_fallthru
          _
        // Predicated region
        $region25: #{tpu_custom_call.1} parent=15 // pred_check
          %p183 = pneg %p90
        $region26: #{tpu_custom_call.1} parent=15 // pred_check_branch
          %185 = sbr.rel (%p183) target = $region28
        $region27: #{tpu_custom_call.1} parent=15 // pred_region
          %s186 = sand.u32 %s18, 1
          %s187 = scalar_lea.sflag [#allocation6], %s186
          %s188 = sand.u32 %s80, 1
          %s189 = smul.addr %s188, 4
          %s190 = scalar_lea.vmem [#allocation7], %s189
          %s191 = smul.u32 4, %s18
          %s193 = ssub.s32 64, 64
          %194 = vsyncadd %s187, %s193
          %s195 = smul.addr %s191, 16
          %s196 = scalar_lea.hbm %s2, %s195
          %s197 = sshll.u32 %s190, 4
          %s198 = int_to_ptr.vmem [resolvable:$true] %s197
          %203 = dma.hbm_to_vmem [thread:$0]  %s196, 64, %s198, %s187, 16, 16, 1
        $region28: #{tpu_custom_call.1} parent=15 // pred_fallthru
          _
      $region16: #{tpu_custom_call.1} parent=5 // pred_fallthru
        _
      %p204 = scmp.le.s32.totalorder 1, %s18
      %p205 = scmp.lt.s32.totalorder %s18, 3
      %p206 = pnand %p204, %p205
      %p207 = pneg %p206
      // Predicated region
      $region29: #{tpu_custom_call.1} parent=5 // pred_check
        _
      $region30: #{tpu_custom_call.1} parent=5 // pred_check_branch
        %209 = sbr.rel (%p206) target = $region32
      $region31: #{tpu_custom_call.1} parent=5 // pred_region
        %s210 = ssub.s32 %s18, 1
        %s211 = sand.u32 %s31, 1
        %s212 = scalar_lea.sflag [#allocation3], %s211
        %s213 = sand.u32 %s31, 1
        %s214 = smul.addr %s213, 32
        %s215 = scalar_lea.vmem [#allocation2], %s214
        // Predicated region
        $region33: #{tpu_custom_call.1} parent=31 // pred_check
          %p216 = pneg %p44
        $region34: #{tpu_custom_call.1} parent=31 // pred_check_branch
          %218 = sbr.rel (%p216) target = $region36
        $region35: #{tpu_custom_call.1} parent=31 // pred_region
          %219 = dma.done %s212, 512
        $region36: #{tpu_custom_call.1} parent=31 // pred_fallthru
          _
        %s220 = sand.u32 %s23, 1
        %s221 = scalar_lea.sflag [#allocation6], %s220
        %s222 = sand.u32 %s57, 1
        %s223 = smul.addr %s222, 32
        %s224 = scalar_lea.vmem [#allocation5], %s223
        // Predicated region
        $region37: #{tpu_custom_call.1} parent=31 // pred_check
          %p225 = pneg %p70
        $region38: #{tpu_custom_call.1} parent=31 // pred_check_branch
          %227 = sbr.rel (%p225) target = $region40
        $region39: #{tpu_custom_call.1} parent=31 // pred_region
          %228 = dma.done %s221, 512
        $region40: #{tpu_custom_call.1} parent=31 // pred_fallthru
          _
        %s229 = sand.u32 %s23, 1
        %s230 = scalar_lea.sflag [#allocation6], %s229
        %s231 = sand.u32 %s83, 1
        %s232 = smul.addr %s231, 4
        %s233 = scalar_lea.vmem [#allocation7], %s232
        // Predicated region
        $region41: #{tpu_custom_call.1} parent=31 // pred_check
          %p234 = pneg %p96
        $region42: #{tpu_custom_call.1} parent=31 // pred_check_branch
          %236 = sbr.rel (%p234) target = $region44
        $region43: #{tpu_custom_call.1} parent=31 // pred_region
          %237 = dma.done %s230, 64
        $region44: #{tpu_custom_call.1} parent=31 // pred_fallthru
          _
        %s238 = sand.u32 %s31, 1
        %s239 = scalar_lea.sflag [#allocation3], %s238
        %s240 = sand.u32 %s31, 1
        %s241 = smul.addr %s240, 32
        %s242 = scalar_lea.vmem [#allocation2], %s241
        %p243 = pneg %p44
        %p244 = pneg %p41
        %s245 = sand.u32 %s23, 1
        %s246 = scalar_lea.sflag [#allocation6], %s245
        %s247 = sand.u32 %s57, 1
        %s248 = smul.addr %s247, 32
        %s249 = scalar_lea.vmem [#allocation5], %s248
        %p250 = pneg %p70
        %p251 = pneg %p67
        %s252 = sand.u32 %s23, 1
        %s253 = scalar_lea.sflag [#allocation6], %s252
        %s254 = sand.u32 %s83, 1
        %s255 = smul.addr %s254, 4
        %s256 = scalar_lea.vmem [#allocation7], %s255
        %p257 = pneg %p96
        %p258 = pneg %p93
        %p259 = pneg %p122
        %p260 = pneg %p119
        %s261 = sand.u32 %s109, 1
        %s262 = scalar_lea.sflag [#allocation4], %s261
        %s263 = sand.u32 %s109, 1
        %s264 = smul.addr %s263, 32
        %s265 = scalar_lea.vmem [#allocation8], %s264
        %s266 = smul.u32 4, %s23
        %s267 = smul.u32 4, %s23
        %s268 = smul.u32 4, %s23
        %s269 = smul.u32 4, %s23
        %v270 = vlaneseq
        %v271 = vshrl.u32 %v270, 7
        %v272 = vadd.s32 %v271, 8
        %v273 = vlaneseq
        %v274 = vand.u32 %v273, 127
        %v275 = vadd.s32 %v271, 16
        %vm276 = vcmp.le.s32.totalorder %v274, %v271
        %vm277 = vcmp.le.s32.totalorder %v274, %v272
        %vm278 = vcmp.le.s32.totalorder %v274, %v275
        %v279 = vld [vmem:[%s215] sm:$0xff]
        %v280 = vld [vmem:[%s224] sm:$0xff]
        %v281 = vld [vmem:[%s233] sm:$0x1]
        %v282 = vlaneseq
        %v283 = vshrl.u32 %v282, 7
        %v284 = vsub.s32 0, %v283
        %v285 = vrot.slane %v280, %v284
        %287 = vbcast.lane.b32.xlu0 %v285, 256
        %v288 = vpop.permute.xlu0 %287
        %s290 = sor.u32 256, 8
        %291 = vbcast.lane.b32.xlu0 %v285, %s290
        %v292 = vpop.permute.xlu0 %291
        %v293 = vlaneseq
        %v294 = vshrl.u32 %v293, 7
        %v295 = vsub.s32 0, %v294
        %v296 = vrot.slane %v279, %v295
        %vm297 = vcmp.eq.s32.totalorder %v271, %v296
        %vm298 = vcmp.eq.s32.totalorder %v272, %v296
        %v299 = vsel %vm297, %v288, 0.0
        %v300 = vsel %vm298, %v292, 0.0
        %vm301 = vcmask 162816
        %v302 = vsel %vm301, %v299, 0.0
        %v303 = vsel %vm301, %v300, 0.0
        %v304 = vadd.f32 %v302, %v303
        %v305 = vrot.slane %v304, 4
        %v306 = vadd.f32 %v304, %v305
        %v307 = vrot.slane %v306, 2
        %v308 = vadd.f32 %v306, %v307
        %v309 = vrot.slane %v308, 1
        %v310 = vadd.f32 %v308, %v309
        %v311 = vadd.f32 %v310, 0.0
        %v312 = vlaneseq
        %v313 = vshrl.u32 %v312, 7
        %v314 = vsub.s32 1, %v313
        %v315 = vrot.slane %v280, %v314
        %317 = vbcast.lane.b32.xlu0 %v315, 256
        %v318 = vpop.permute.xlu0 %317
        %s320 = sor.u32 256, 8
        %321 = vbcast.lane.b32.xlu0 %v315, %s320
        %v322 = vpop.permute.xlu0 %321
        %v323 = vlaneseq
        %v324 = vshrl.u32 %v323, 7
        %v325 = vsub.s32 1, %v324
        %v326 = vrot.slane %v279, %v325
        %vm327 = vcmp.eq.s32.totalorder %v271, %v326
        %vm328 = vcmp.eq.s32.totalorder %v272, %v326
        %v329 = vsel %vm327, %v318, 0.0
        %v330 = vsel %vm328, %v322, 0.0
        %v331 = vsel %vm301, %v329, 0.0
        %v332 = vsel %vm301, %v330, 0.0
        %v333 = vadd.f32 %v331, %v332
        %v334 = vrot.slane %v333, 4
        %v335 = vadd.f32 %v333, %v334
        %v336 = vrot.slane %v335, 2
        %v337 = vadd.f32 %v335, %v336
        %v338 = vrot.slane %v337, 1
        %v339 = vadd.f32 %v337, %v338
        %v340 = vadd.f32 %v311, %v339
        %v341 = vlaneseq
        %v342 = vshrl.u32 %v341, 7
        %v343 = vsub.s32 2, %v342
        %v344 = vrot.slane %v280, %v343
        %346 = vbcast.lane.b32.xlu0 %v344, 256
        %v347 = vpop.permute.xlu0 %346
        %s349 = sor.u32 256, 8
        %350 = vbcast.lane.b32.xlu0 %v344, %s349
        %v351 = vpop.permute.xlu0 %350
        %v352 = vlaneseq
        %v353 = vshrl.u32 %v352, 7
        %v354 = vsub.s32 2, %v353
        %v355 = vrot.slane %v279, %v354
        %vm356 = vcmp.eq.s32.totalorder %v271, %v355
        %vm357 = vcmp.eq.s32.totalorder %v272, %v355
        %v358 = vsel %vm356, %v347, 0.0
        %v359 = vsel %vm357, %v351, 0.0
        %v360 = vsel %vm301, %v358, 0.0
        %v361 = vsel %vm301, %v359, 0.0
        %v362 = vadd.f32 %v360, %v361
        %v363 = vrot.slane %v362, 4
        %v364 = vadd.f32 %v362, %v363
        %v365 = vrot.slane %v364, 2
        %v366 = vadd.f32 %v364, %v365
        %v367 = vrot.slane %v366, 1
        %v368 = vadd.f32 %v366, %v367
        %v369 = vadd.f32 %v340, %v368
        %v370 = vlaneseq
        %v371 = vshrl.u32 %v370, 7
        %v372 = vsub.s32 3, %v371
        %v373 = vrot.slane %v280, %v372
        %375 = vbcast.lane.b32.xlu0 %v373, 256
        %v376 = vpop.permute.xlu0 %375
        %s378 = sor.u32 256, 8
        %379 = vbcast.lane.b32.xlu0 %v373, %s378
        %v380 = vpop.permute.xlu0 %379
        %v381 = vlaneseq
        %v382 = vshrl.u32 %v381, 7
        %v383 = vsub.s32 3, %v382
        %v384 = vrot.slane %v279, %v383
        %vm385 = vcmp.eq.s32.totalorder %v271, %v384
        %vm386 = vcmp.eq.s32.totalorder %v272, %v384
        %v387 = vsel %vm385, %v376, 0.0
        %v388 = vsel %vm386, %v380, 0.0
        %v389 = vsel %vm301, %v387, 0.0
        %v390 = vsel %vm301, %v388, 0.0
        %v391 = vadd.f32 %v389, %v390
        %v392 = vrot.slane %v391, 4
        %v393 = vadd.f32 %v391, %v392
        %v394 = vrot.slane %v393, 2
        %v395 = vadd.f32 %v393, %v394
        %v396 = vrot.slane %v395, 1
        %v397 = vadd.f32 %v395, %v396
        %v398 = vadd.f32 %v369, %v397
        %v399 = vlaneseq
        %v400 = vshrl.u32 %v399, 7
        %v401 = vsub.s32 4, %v400
        %v402 = vrot.slane %v280, %v401
        %404 = vbcast.lane.b32.xlu0 %v402, 256
        %v405 = vpop.permute.xlu0 %404
        %s407 = sor.u32 256, 8
        %408 = vbcast.lane.b32.xlu0 %v402, %s407
        %v409 = vpop.permute.xlu0 %408
        %v410 = vlaneseq
        %v411 = vshrl.u32 %v410, 7
        %v412 = vsub.s32 4, %v411
        %v413 = vrot.slane %v279, %v412
        %vm414 = vcmp.eq.s32.totalorder %v271, %v413
        %vm415 = vcmp.eq.s32.totalorder %v272, %v413
        %v416 = vsel %vm414, %v405, 0.0
        %v417 = vsel %vm415, %v409, 0.0
        %v418 = vsel %vm301, %v416, 0.0
        %v419 = vsel %vm301, %v417, 0.0
        %v420 = vadd.f32 %v418, %v419
        %v421 = vrot.slane %v420, 4
        %v422 = vadd.f32 %v420, %v421
        %v423 = vrot.slane %v422, 2
        %v424 = vadd.f32 %v422, %v423
        %v425 = vrot.slane %v424, 1
        %v426 = vadd.f32 %v424, %v425
        %v427 = vadd.f32 %v398, %v426
        %v428 = vlaneseq
        %v429 = vshrl.u32 %v428, 7
        %v430 = vsub.s32 5, %v429
        %v431 = vrot.slane %v280, %v430
        %433 = vbcast.lane.b32.xlu0 %v431, 256
        %v434 = vpop.permute.xlu0 %433
        %s436 = sor.u32 256, 8
        %437 = vbcast.lane.b32.xlu0 %v431, %s436
        %v438 = vpop.permute.xlu0 %437
        %v439 = vlaneseq
        %v440 = vshrl.u32 %v439, 7
        %v441 = vsub.s32 5, %v440
        %v442 = vrot.slane %v279, %v441
        %vm443 = vcmp.eq.s32.totalorder %v271, %v442
        %vm444 = vcmp.eq.s32.totalorder %v272, %v442
        %v445 = vsel %vm443, %v434, 0.0
        %v446 = vsel %vm444, %v438, 0.0
        %v447 = vsel %vm301, %v445, 0.0
        %v448 = vsel %vm301, %v446, 0.0
        %v449 = vadd.f32 %v447, %v448
        %v450 = vrot.slane %v449, 4
        %v451 = vadd.f32 %v449, %v450
        %v452 = vrot.slane %v451, 2
        %v453 = vadd.f32 %v451, %v452
        %v454 = vrot.slane %v453, 1
        %v455 = vadd.f32 %v453, %v454
        %v456 = vadd.f32 %v427, %v455
        %v457 = vlaneseq
        %v458 = vshrl.u32 %v457, 7
        %v459 = vsub.s32 6, %v458
        %v460 = vrot.slane %v280, %v459
        %462 = vbcast.lane.b32.xlu0 %v460, 256
        %v463 = vpop.permute.xlu0 %462
        %s465 = sor.u32 256, 8
        %466 = vbcast.lane.b32.xlu0 %v460, %s465
        %v467 = vpop.permute.xlu0 %466
        %v468 = vlaneseq
        %v469 = vshrl.u32 %v468, 7
        %v470 = vsub.s32 6, %v469
        %v471 = vrot.slane %v279, %v470
        %vm472 = vcmp.eq.s32.totalorder %v271, %v471
        %vm473 = vcmp.eq.s32.totalorder %v272, %v471
        %v474 = vsel %vm472, %v463, 0.0
        %v475 = vsel %vm473, %v467, 0.0
        %v476 = vsel %vm301, %v474, 0.0
        %v477 = vsel %vm301, %v475, 0.0
        %v478 = vadd.f32 %v476, %v477
        %v479 = vrot.slane %v478, 4
        %v480 = vadd.f32 %v478, %v479
        %v481 = vrot.slane %v480, 2
        %v482 = vadd.f32 %v480, %v481
        %v483 = vrot.slane %v482, 1
        %v484 = vadd.f32 %v482, %v483
        %v485 = vadd.f32 %v456, %v484
        %v486 = vlaneseq
        %v487 = vshrl.u32 %v486, 7
        %v488 = vsub.s32 7, %v487
        %v489 = vrot.slane %v280, %v488
        %491 = vbcast.lane.b32.xlu0 %v489, 256
        %v492 = vpop.permute.xlu0 %491
        %s494 = sor.u32 256, 8
        %495 = vbcast.lane.b32.xlu0 %v489, %s494
        %v496 = vpop.permute.xlu0 %495
        %v497 = vlaneseq
        %v498 = vshrl.u32 %v497, 7
        %v499 = vsub.s32 7, %v498
        %v500 = vrot.slane %v279, %v499
        %vm501 = vcmp.eq.s32.totalorder %v271, %v500
        %vm502 = vcmp.eq.s32.totalorder %v272, %v500
        %v503 = vsel %vm501, %v492, 0.0
        %v504 = vsel %vm502, %v496, 0.0
        %v505 = vsel %vm301, %v503, 0.0
        %v506 = vsel %vm301, %v504, 0.0
        %v507 = vadd.f32 %v505, %v506
        %v508 = vrot.slane %v507, 4
        %v509 = vadd.f32 %v507, %v508
        %v510 = vrot.slane %v509, 2
        %v511 = vadd.f32 %v509, %v510
        %v512 = vrot.slane %v511, 1
        %v513 = vadd.f32 %v511, %v512
        %v514 = vadd.f32 %v485, %v513
        %vm515 = vcmp.gt.f32.partialorder %v514, 0.0
        %v516 = vsel %vm515, %v514, 1.0
        %v517 = vrcp.pop %v516
        %v518 = vmul.f32 5.625, %v517
        %v519 = vsel %vm515, %v518, 0.0
        %v520 = vadd.f32 %v519, 0.5
        %v521 = vsel %vm301, %v520, inf
        %522 = vmin.xlane.f32.xlu0 %v521
        %v523 = vpop.xlane.xlu0 %522
        %s524 = vtos %v523
        %v525 = vstv %s524
        %vm526 = vcmp.eq.f32.partialorder %v520, %v525
        %v527 = vsel %vm526, %v274, 20
        %v528 = vsel %vm301, %v527, 2147483647
        %v529 = vand.u32 %v528, 65535
        %v530 = vshra.s32 %v528, 16
        %v531 = vcvt.s32.f32 %v529
        %v532 = vcvt.s32.f32 %v530
        %533 = vmin.xlane.f32.xlu0 %v532
        %v534 = vpop.xlane.xlu0 %533
        %vm535 = vcmp.eq.f32.partialorder %v532, %v534
        %v536 = vsel %vm535, %v531, inf
        %537 = vmin.xlane.f32.xlu0 %v536
        %v538 = vpop.xlane.xlu0 %537
        %v539 = vcvt.f32.s32 %v538
        %v540 = vcvt.f32.s32 %v534
        %v541 = vshll.u32 %v540, 16
        %v542 = vadd.s32 %v541, %v539
        %s543 = vtos %v542
        %vm544 = vcmask 155648
        %v545 = vsel %vm544, %v520, 0.0
        %546 = vadd.xlane.f32.xlu0 %v545
        %v547 = vpop.xlane.xlu0 %546
        %v548 = vrot.slane %v547, 4
        %v549 = vadd.f32 %v547, %v548
        %v550 = vrot.slane %v549, 2
        %v551 = vadd.f32 %v549, %v550
        %v552 = vrot.slane %v551, 1
        %v553 = vadd.f32 %v551, %v552
        %s554 = vtos %v553
        %v555 = vstv %s554
        %v556 = vrcp.pop %v555
        %v557 = vmul.f32 %v520, %v556
        %v558 = vsel %vm276, %v557, 0.0
        %v559 = vsel %vm277, %v557, 0.0
        %v560 = vsel %vm278, %v557, 0.0
        %v561 = vsel %vm301, %v558, 0.0
        %562 = vadd.xlane.f32.xlu0 %v561
        %v563 = vpop.xlane.xlu0 %562
        %v564 = vsel %vm301, %v559, 0.0
        %565 = vadd.xlane.f32.xlu0 %v564
        %v566 = vpop.xlane.xlu0 %565
        %vm567 = vcmask 158720
        %v568 = vsel %vm567, %v560, 0.0
        %569 = vadd.xlane.f32.xlu0 %v568
        %v570 = vpop.xlane.xlu0 %569
        %v572 = vlaneseq
        %v573 = vshrl.u32 %v572, 7
        %v574 = vsub.s32 0, %v573
        %v575 = vrot.slane %v281, %v574
        %vm577 = vcmp.lt.f32.partialorder %v563, %v575
        %vm578 = vcmp.lt.f32.partialorder %v566, %v575
        %vm579 = vcmp.lt.f32.partialorder %v570, %v575
        %v580 = vsel %vm577, 1, 0
        %v581 = vsel %vm578, 1, 0
        %v582 = vsel %vm579, 1, 0
        %v583 = vcvt.s32.f32 %v580
        %v584 = vcvt.s32.f32 %v581
        %v585 = vcvt.s32.f32 %v582
        %v586 = vsel %vm301, %v583, 0.0
        %v587 = vsel %vm301, %v584, 0.0
        %v588 = vadd.f32 %v586, %v587
        %v589 = vsel %vm567, %v585, 0.0
        %v590 = vadd.f32 %v588, %v589
        %v591 = vrot.slane %v590, 4
        %v592 = vadd.f32 %v590, %v591
        %v593 = vrot.slane %v592, 2
        %v594 = vadd.f32 %v592, %v593
        %v595 = vrot.slane %v594, 1
        %v596 = vadd.f32 %v594, %v595
        %v597 = vmin.f32 %v596, 19.0
        %vm598 = vcmp.eq.s32.totalorder %v274, 0
        %vm599 = vcmp.eq.s32.totalorder %v274, 1
        %s600 = scvt.s32.f32 %s543
        %v601 = vstv %s600
        %v602 = vsel %vm599, %v601, 0.0
        %v603 = vsel %vm598, %v525, %v602
        %604 = vst.msk [vmem:[%s265] sm:$0x1] %vm544, %v520
        %605 = vst.msk [vmem:[%s265 + $0x1] sm:$0x1] %vm544, %v597
        %606 = vst.msk [vmem:[%s265 + $0x2] sm:$0x1] %vm544, %v603
        %s607 = scalar_lea.vmem %s215, 8 [#allocation2]
        %v608 = vld [vmem:[%s607] sm:$0xff]
        %s609 = scalar_lea.vmem %s224, 8 [#allocation5]
        %v610 = vld [vmem:[%s609] sm:$0xff]
        %s611 = scalar_lea.vmem %s233, 1 [#allocation7]
        %v612 = vld [vmem:[%s611] sm:$0x1]
        %v613 = vlaneseq
        %v614 = vshrl.u32 %v613, 7
        %v615 = vsub.s32 0, %v614
        %v616 = vrot.slane %v610, %v615
        %618 = vbcast.lane.b32.xlu0 %v616, 256
        %v619 = vpop.permute.xlu0 %618
        %s621 = sor.u32 256, 8
        %622 = vbcast.lane.b32.xlu0 %v616, %s621
        %v623 = vpop.permute.xlu0 %622
        %v624 = vlaneseq
        %v625 = vshrl.u32 %v624, 7
        %v626 = vsub.s32 0, %v625
        %v627 = vrot.slane %v608, %v626
        %vm628 = vcmp.eq.s32.totalorder %v271, %v627
        %vm629 = vcmp.eq.s32.totalorder %v272, %v627
        %v630 = vsel %vm628, %v619, 0.0
        %v631 = vsel %vm629, %v623, 0.0
        %v632 = vsel %vm301, %v630, 0.0
        %v633 = vsel %vm301, %v631, 0.0
        %v634 = vadd.f32 %v632, %v633
        %v635 = vrot.slane %v634, 4
        %v636 = vadd.f32 %v634, %v635
        %v637 = vrot.slane %v636, 2
        %v638 = vadd.f32 %v636, %v637
        %v639 = vrot.slane %v638, 1
        %v640 = vadd.f32 %v638, %v639
        %v641 = vadd.f32 %v640, 0.0
        %v642 = vlaneseq
        %v643 = vshrl.u32 %v642, 7
        %v644 = vsub.s32 1, %v643
        %v645 = vrot.slane %v610, %v644
        %647 = vbcast.lane.b32.xlu0 %v645, 256
        %v648 = vpop.permute.xlu0 %647
        %s650 = sor.u32 256, 8
        %651 = vbcast.lane.b32.xlu0 %v645, %s650
        %v652 = vpop.permute.xlu0 %651
        %v653 = vlaneseq
        %v654 = vshrl.u32 %v653, 7
        %v655 = vsub.s32 1, %v654
        %v656 = vrot.slane %v608, %v655
        %vm657 = vcmp.eq.s32.totalorder %v271, %v656
        %vm658 = vcmp.eq.s32.totalorder %v272, %v656
        %v659 = vsel %vm657, %v648, 0.0
        %v660 = vsel %vm658, %v652, 0.0
        %v661 = vsel %vm301, %v659, 0.0
        %v662 = vsel %vm301, %v660, 0.0
        %v663 = vadd.f32 %v661, %v662
        %v664 = vrot.slane %v663, 4
        %v665 = vadd.f32 %v663, %v664
        %v666 = vrot.slane %v665, 2
        %v667 = vadd.f32 %v665, %v666
        %v668 = vrot.slane %v667, 1
        %v669 = vadd.f32 %v667, %v668
        %v670 = vadd.f32 %v641, %v669
        %v671 = vlaneseq
        %v672 = vshrl.u32 %v671, 7
        %v673 = vsub.s32 2, %v672
        %v674 = vrot.slane %v610, %v673
        %676 = vbcast.lane.b32.xlu0 %v674, 256
        %v677 = vpop.permute.xlu0 %676
        %s679 = sor.u32 256, 8
        %680 = vbcast.lane.b32.xlu0 %v674, %s679
        %v681 = vpop.permute.xlu0 %680
        %v682 = vlaneseq
        %v683 = vshrl.u32 %v682, 7
        %v684 = vsub.s32 2, %v683
        %v685 = vrot.slane %v608, %v684
        %vm686 = vcmp.eq.s32.totalorder %v271, %v685
        %vm687 = vcmp.eq.s32.totalorder %v272, %v685
        %v688 = vsel %vm686, %v677, 0.0
        %v689 = vsel %vm687, %v681, 0.0
        %v690 = vsel %vm301, %v688, 0.0
        %v691 = vsel %vm301, %v689, 0.0
        %v692 = vadd.f32 %v690, %v691
        %v693 = vrot.slane %v692, 4
        %v694 = vadd.f32 %v692, %v693
        %v695 = vrot.slane %v694, 2
        %v696 = vadd.f32 %v694, %v695
        %v697 = vrot.slane %v696, 1
        %v698 = vadd.f32 %v696, %v697
        %v699 = vadd.f32 %v670, %v698
        %v700 = vlaneseq
        %v701 = vshrl.u32 %v700, 7
        %v702 = vsub.s32 3, %v701
        %v703 = vrot.slane %v610, %v702
        %705 = vbcast.lane.b32.xlu0 %v703, 256
        %v706 = vpop.permute.xlu0 %705
        %s708 = sor.u32 256, 8
        %709 = vbcast.lane.b32.xlu0 %v703, %s708
        %v710 = vpop.permute.xlu0 %709
        %v711 = vlaneseq
        %v712 = vshrl.u32 %v711, 7
        %v713 = vsub.s32 3, %v712
        %v714 = vrot.slane %v608, %v713
        %vm715 = vcmp.eq.s32.totalorder %v271, %v714
        %vm716 = vcmp.eq.s32.totalorder %v272, %v714
        %v717 = vsel %vm715, %v706, 0.0
        %v718 = vsel %vm716, %v710, 0.0
        %v719 = vsel %vm301, %v717, 0.0
        %v720 = vsel %vm301, %v718, 0.0
        %v721 = vadd.f32 %v719, %v720
        %v722 = vrot.slane %v721, 4
        %v723 = vadd.f32 %v721, %v722
        %v724 = vrot.slane %v723, 2
        %v725 = vadd.f32 %v723, %v724
        %v726 = vrot.slane %v725, 1
        %v727 = vadd.f32 %v725, %v726
        %v728 = vadd.f32 %v699, %v727
        %v729 = vlaneseq
        %v730 = vshrl.u32 %v729, 7
        %v731 = vsub.s32 4, %v730
        %v732 = vrot.slane %v610, %v731
        %734 = vbcast.lane.b32.xlu0 %v732, 256
        %v735 = vpop.permute.xlu0 %734
        %s737 = sor.u32 256, 8
        %738 = vbcast.lane.b32.xlu0 %v732, %s737
        %v739 = vpop.permute.xlu0 %738
        %v740 = vlaneseq
        %v741 = vshrl.u32 %v740, 7
        %v742 = vsub.s32 4, %v741
        %v743 = vrot.slane %v608, %v742
        %vm744 = vcmp.eq.s32.totalorder %v271, %v743
        %vm745 = vcmp.eq.s32.totalorder %v272, %v743
        %v746 = vsel %vm744, %v735, 0.0
        %v747 = vsel %vm745, %v739, 0.0
        %v748 = vsel %vm301, %v746, 0.0
        %v749 = vsel %vm301, %v747, 0.0
        %v750 = vadd.f32 %v748, %v749
        %v751 = vrot.slane %v750, 4
        %v752 = vadd.f32 %v750, %v751
        %v753 = vrot.slane %v752, 2
        %v754 = vadd.f32 %v752, %v753
        %v755 = vrot.slane %v754, 1
        %v756 = vadd.f32 %v754, %v755
        %v757 = vadd.f32 %v728, %v756
        %v758 = vlaneseq
        %v759 = vshrl.u32 %v758, 7
        %v760 = vsub.s32 5, %v759
        %v761 = vrot.slane %v610, %v760
        %763 = vbcast.lane.b32.xlu0 %v761, 256
        %v764 = vpop.permute.xlu0 %763
        %s766 = sor.u32 256, 8
        %767 = vbcast.lane.b32.xlu0 %v761, %s766
        %v768 = vpop.permute.xlu0 %767
        %v769 = vlaneseq
        %v770 = vshrl.u32 %v769, 7
        %v771 = vsub.s32 5, %v770
        %v772 = vrot.slane %v608, %v771
        %vm773 = vcmp.eq.s32.totalorder %v271, %v772
        %vm774 = vcmp.eq.s32.totalorder %v272, %v772
        %v775 = vsel %vm773, %v764, 0.0
        %v776 = vsel %vm774, %v768, 0.0
        %v777 = vsel %vm301, %v775, 0.0
        %v778 = vsel %vm301, %v776, 0.0
        %v779 = vadd.f32 %v777, %v778
        %v780 = vrot.slane %v779, 4
        %v781 = vadd.f32 %v779, %v780
        %v782 = vrot.slane %v781, 2
        %v783 = vadd.f32 %v781, %v782
        %v784 = vrot.slane %v783, 1
        %v785 = vadd.f32 %v783, %v784
        %v786 = vadd.f32 %v757, %v785
        %v787 = vlaneseq
        %v788 = vshrl.u32 %v787, 7
        %v789 = vsub.s32 6, %v788
        %v790 = vrot.slane %v610, %v789
        %792 = vbcast.lane.b32.xlu0 %v790, 256
        %v793 = vpop.permute.xlu0 %792
        %s795 = sor.u32 256, 8
        %796 = vbcast.lane.b32.xlu0 %v790, %s795
        %v797 = vpop.permute.xlu0 %796
        %v798 = vlaneseq
        %v799 = vshrl.u32 %v798, 7
        %v800 = vsub.s32 6, %v799
        %v801 = vrot.slane %v608, %v800
        %vm802 = vcmp.eq.s32.totalorder %v271, %v801
        %vm803 = vcmp.eq.s32.totalorder %v272, %v801
        %v804 = vsel %vm802, %v793, 0.0
        %v805 = vsel %vm803, %v797, 0.0
        %v806 = vsel %vm301, %v804, 0.0
        %v807 = vsel %vm301, %v805, 0.0
        %v808 = vadd.f32 %v806, %v807
        %v809 = vrot.slane %v808, 4
        %v810 = vadd.f32 %v808, %v809
        %v811 = vrot.slane %v810, 2
        %v812 = vadd.f32 %v810, %v811
        %v813 = vrot.slane %v812, 1
        %v814 = vadd.f32 %v812, %v813
        %v815 = vadd.f32 %v786, %v814
        %v816 = vlaneseq
        %v817 = vshrl.u32 %v816, 7
        %v818 = vsub.s32 7, %v817
        %v819 = vrot.slane %v610, %v818
        %821 = vbcast.lane.b32.xlu0 %v819, 256
        %v822 = vpop.permute.xlu0 %821
        %s824 = sor.u32 256, 8
        %825 = vbcast.lane.b32.xlu0 %v819, %s824
        %v826 = vpop.permute.xlu0 %825
        %v827 = vlaneseq
        %v828 = vshrl.u32 %v827, 7
        %v829 = vsub.s32 7, %v828
        %v830 = vrot.slane %v608, %v829
        %vm831 = vcmp.eq.s32.totalorder %v271, %v830
        %vm832 = vcmp.eq.s32.totalorder %v272, %v830
        %v833 = vsel %vm831, %v822, 0.0
        %v834 = vsel %vm832, %v826, 0.0
        %v835 = vsel %vm301, %v833, 0.0
        %v836 = vsel %vm301, %v834, 0.0
        %v837 = vadd.f32 %v835, %v836
        %v838 = vrot.slane %v837, 4
        %v839 = vadd.f32 %v837, %v838
        %v840 = vrot.slane %v839, 2
        %v841 = vadd.f32 %v839, %v840
        %v842 = vrot.slane %v841, 1
        %v843 = vadd.f32 %v841, %v842
        %v844 = vadd.f32 %v815, %v843
        %vm845 = vcmp.gt.f32.partialorder %v844, 0.0
        %v846 = vsel %vm845, %v844, 1.0
        %v847 = vrcp.pop %v846
        %v848 = vmul.f32 5.625, %v847
        %v849 = vsel %vm845, %v848, 0.0
        %v850 = vadd.f32 %v849, 0.5
        %v851 = vsel %vm301, %v850, inf
        %852 = vmin.xlane.f32.xlu0 %v851
        %v853 = vpop.xlane.xlu0 %852
        %s854 = vtos %v853
        %v855 = vstv %s854
        %vm856 = vcmp.eq.f32.partialorder %v850, %v855
        %v857 = vsel %vm856, %v274, 20
        %v858 = vsel %vm301, %v857, 2147483647
        %v859 = vand.u32 %v858, 65535
        %v860 = vshra.s32 %v858, 16
        %v861 = vcvt.s32.f32 %v859
        %v862 = vcvt.s32.f32 %v860
        %863 = vmin.xlane.f32.xlu0 %v862
        %v864 = vpop.xlane.xlu0 %863
        %vm865 = vcmp.eq.f32.partialorder %v862, %v864
        %v866 = vsel %vm865, %v861, inf
        %867 = vmin.xlane.f32.xlu0 %v866
        %v868 = vpop.xlane.xlu0 %867
        %v869 = vcvt.f32.s32 %v868
        %v870 = vcvt.f32.s32 %v864
        %v871 = vshll.u32 %v870, 16
        %v872 = vadd.s32 %v871, %v869
        %s873 = vtos %v872
        %v874 = vsel %vm544, %v850, 0.0
        %875 = vadd.xlane.f32.xlu0 %v874
        %v876 = vpop.xlane.xlu0 %875
        %v877 = vrot.slane %v876, 4
        %v878 = vadd.f32 %v876, %v877
        %v879 = vrot.slane %v878, 2
        %v880 = vadd.f32 %v878, %v879
        %v881 = vrot.slane %v880, 1
        %v882 = vadd.f32 %v880, %v881
        %s883 = vtos %v882
        %v884 = vstv %s883
        %v885 = vrcp.pop %v884
        %v886 = vmul.f32 %v850, %v885
        %v887 = vsel %vm276, %v886, 0.0
        %v888 = vsel %vm277, %v886, 0.0
        %v889 = vsel %vm278, %v886, 0.0
        %v890 = vsel %vm301, %v887, 0.0
        %891 = vadd.xlane.f32.xlu0 %v890
        %v892 = vpop.xlane.xlu0 %891
        %v893 = vsel %vm301, %v888, 0.0
        %894 = vadd.xlane.f32.xlu0 %v893
        %v895 = vpop.xlane.xlu0 %894
        %v896 = vsel %vm567, %v889, 0.0
        %897 = vadd.xlane.f32.xlu0 %v896
        %v898 = vpop.xlane.xlu0 %897
        %v900 = vlaneseq
        %v901 = vshrl.u32 %v900, 7
        %v902 = vsub.s32 0, %v901
        %v903 = vrot.slane %v612, %v902
        %vm905 = vcmp.lt.f32.partialorder %v892, %v903
        %vm906 = vcmp.lt.f32.partialorder %v895, %v903
        %vm907 = vcmp.lt.f32.partialorder %v898, %v903
        %v908 = vsel %vm905, 1, 0
        %v909 = vsel %vm906, 1, 0
        %v910 = vsel %vm907, 1, 0
        %v911 = vcvt.s32.f32 %v908
        %v912 = vcvt.s32.f32 %v909
        %v913 = vcvt.s32.f32 %v910
        %v914 = vsel %vm301, %v911, 0.0
        %v915 = vsel %vm301, %v912, 0.0
        %v916 = vadd.f32 %v914, %v915
        %v917 = vsel %vm567, %v913, 0.0
        %v918 = vadd.f32 %v916, %v917
        %v919 = vrot.slane %v918, 4
        %v920 = vadd.f32 %v918, %v919
        %v921 = vrot.slane %v920, 2
        %v922 = vadd.f32 %v920, %v921
        %v923 = vrot.slane %v922, 1
        %v924 = vadd.f32 %v922, %v923
        %v925 = vmin.f32 %v924, 19.0
        %s926 = scvt.s32.f32 %s873
        %v927 = vstv %s926
        %v928 = vsel %vm599, %v927, 0.0
        %v929 = vsel %vm598, %v855, %v928
        %s930 = scalar_lea.vmem %s265, 8 [#allocation8]
        %931 = vst.msk [vmem:[%s930] sm:$0x1] %vm544, %v850
        %932 = vst.msk [vmem:[%s930 + $0x1] sm:$0x1] %vm544, %v925
        %933 = vst.msk [vmem:[%s930 + $0x2] sm:$0x1] %vm544, %v929
        %s934 = scalar_lea.vmem %s215, 16 [#allocation2]
        %v935 = vld [vmem:[%s934] sm:$0xff]
        %s936 = scalar_lea.vmem %s224, 16 [#allocation5]
        %v937 = vld [vmem:[%s936] sm:$0xff]
        %s938 = scalar_lea.vmem %s233, 2 [#allocation7]
        %v939 = vld [vmem:[%s938] sm:$0x1]
        %v940 = vlaneseq
        %v941 = vshrl.u32 %v940, 7
        %v942 = vsub.s32 0, %v941
        %v943 = vrot.slane %v937, %v942
        %945 = vbcast.lane.b32.xlu0 %v943, 256
        %v946 = vpop.permute.xlu0 %945
        %s948 = sor.u32 256, 8
        %949 = vbcast.lane.b32.xlu0 %v943, %s948
        %v950 = vpop.permute.xlu0 %949
        %v951 = vlaneseq
        %v952 = vshrl.u32 %v951, 7
        %v953 = vsub.s32 0, %v952
        %v954 = vrot.slane %v935, %v953
        %vm955 = vcmp.eq.s32.totalorder %v271, %v954
        %vm956 = vcmp.eq.s32.totalorder %v272, %v954
        %v957 = vsel %vm955, %v946, 0.0
        %v958 = vsel %vm956, %v950, 0.0
        %v959 = vsel %vm301, %v957, 0.0
        %v960 = vsel %vm301, %v958, 0.0
        %v961 = vadd.f32 %v959, %v960
        %v962 = vrot.slane %v961, 4
        %v963 = vadd.f32 %v961, %v962
        %v964 = vrot.slane %v963, 2
        %v965 = vadd.f32 %v963, %v964
        %v966 = vrot.slane %v965, 1
        %v967 = vadd.f32 %v965, %v966
        %v968 = vadd.f32 %v967, 0.0
        %v969 = vlaneseq
        %v970 = vshrl.u32 %v969, 7
        %v971 = vsub.s32 1, %v970
        %v972 = vrot.slane %v937, %v971
        %974 = vbcast.lane.b32.xlu0 %v972, 256
        %v975 = vpop.permute.xlu0 %974
        %s977 = sor.u32 256, 8
        %978 = vbcast.lane.b32.xlu0 %v972, %s977
        %v979 = vpop.permute.xlu0 %978
        %v980 = vlaneseq
        %v981 = vshrl.u32 %v980, 7
        %v982 = vsub.s32 1, %v981
        %v983 = vrot.slane %v935, %v982
        %vm984 = vcmp.eq.s32.totalorder %v271, %v983
        %vm985 = vcmp.eq.s32.totalorder %v272, %v983
        %v986 = vsel %vm984, %v975, 0.0
        %v987 = vsel %vm985, %v979, 0.0
        %v988 = vsel %vm301, %v986, 0.0
        %v989 = vsel %vm301, %v987, 0.0
        %v990 = vadd.f32 %v988, %v989
        %v991 = vrot.slane %v990, 4
        %v992 = vadd.f32 %v990, %v991
        %v993 = vrot.slane %v992, 2
        %v994 = vadd.f32 %v992, %v993
        %v995 = vrot.slane %v994, 1
        %v996 = vadd.f32 %v994, %v995
        %v997 = vadd.f32 %v968, %v996
        %v998 = vlaneseq
        %v999 = vshrl.u32 %v998, 7
        %v1000 = vsub.s32 2, %v999
        %v1001 = vrot.slane %v937, %v1000
        %1003 = vbcast.lane.b32.xlu0 %v1001, 256
        %v1004 = vpop.permute.xlu0 %1003
        %s1006 = sor.u32 256, 8
        %1007 = vbcast.lane.b32.xlu0 %v1001, %s1006
        %v1008 = vpop.permute.xlu0 %1007
        %v1009 = vlaneseq
        %v1010 = vshrl.u32 %v1009, 7
        %v1011 = vsub.s32 2, %v1010
        %v1012 = vrot.slane %v935, %v1011
        %vm1013 = vcmp.eq.s32.totalorder %v271, %v1012
        %vm1014 = vcmp.eq.s32.totalorder %v272, %v1012
        %v1015 = vsel %vm1013, %v1004, 0.0
        %v1016 = vsel %vm1014, %v1008, 0.0
        %v1017 = vsel %vm301, %v1015, 0.0
        %v1018 = vsel %vm301, %v1016, 0.0
        %v1019 = vadd.f32 %v1017, %v1018
        %v1020 = vrot.slane %v1019, 4
        %v1021 = vadd.f32 %v1019, %v1020
        %v1022 = vrot.slane %v1021, 2
        %v1023 = vadd.f32 %v1021, %v1022
        %v1024 = vrot.slane %v1023, 1
        %v1025 = vadd.f32 %v1023, %v1024
        %v1026 = vadd.f32 %v997, %v1025
        %v1027 = vlaneseq
        %v1028 = vshrl.u32 %v1027, 7
        %v1029 = vsub.s32 3, %v1028
        %v1030 = vrot.slane %v937, %v1029
        %1032 = vbcast.lane.b32.xlu0 %v1030, 256
        %v1033 = vpop.permute.xlu0 %1032
        %s1035 = sor.u32 256, 8
        %1036 = vbcast.lane.b32.xlu0 %v1030, %s1035
        %v1037 = vpop.permute.xlu0 %1036
        %v1038 = vlaneseq
        %v1039 = vshrl.u32 %v1038, 7
        %v1040 = vsub.s32 3, %v1039
        %v1041 = vrot.slane %v935, %v1040
        %vm1042 = vcmp.eq.s32.totalorder %v271, %v1041
        %vm1043 = vcmp.eq.s32.totalorder %v272, %v1041
        %v1044 = vsel %vm1042, %v1033, 0.0
        %v1045 = vsel %vm1043, %v1037, 0.0
        %v1046 = vsel %vm301, %v1044, 0.0
        %v1047 = vsel %vm301, %v1045, 0.0
        %v1048 = vadd.f32 %v1046, %v1047
        %v1049 = vrot.slane %v1048, 4
        %v1050 = vadd.f32 %v1048, %v1049
        %v1051 = vrot.slane %v1050, 2
        %v1052 = vadd.f32 %v1050, %v1051
        %v1053 = vrot.slane %v1052, 1
        %v1054 = vadd.f32 %v1052, %v1053
        %v1055 = vadd.f32 %v1026, %v1054
        %v1056 = vlaneseq
        %v1057 = vshrl.u32 %v1056, 7
        %v1058 = vsub.s32 4, %v1057
        %v1059 = vrot.slane %v937, %v1058
        %1061 = vbcast.lane.b32.xlu0 %v1059, 256
        %v1062 = vpop.permute.xlu0 %1061
        %s1064 = sor.u32 256, 8
        %1065 = vbcast.lane.b32.xlu0 %v1059, %s1064
        %v1066 = vpop.permute.xlu0 %1065
        %v1067 = vlaneseq
        %v1068 = vshrl.u32 %v1067, 7
        %v1069 = vsub.s32 4, %v1068
        %v1070 = vrot.slane %v935, %v1069
        %vm1071 = vcmp.eq.s32.totalorder %v271, %v1070
        %vm1072 = vcmp.eq.s32.totalorder %v272, %v1070
        %v1073 = vsel %vm1071, %v1062, 0.0
        %v1074 = vsel %vm1072, %v1066, 0.0
        %v1075 = vsel %vm301, %v1073, 0.0
        %v1076 = vsel %vm301, %v1074, 0.0
        %v1077 = vadd.f32 %v1075, %v1076
        %v1078 = vrot.slane %v1077, 4
        %v1079 = vadd.f32 %v1077, %v1078
        %v1080 = vrot.slane %v1079, 2
        %v1081 = vadd.f32 %v1079, %v1080
        %v1082 = vrot.slane %v1081, 1
        %v1083 = vadd.f32 %v1081, %v1082
        %v1084 = vadd.f32 %v1055, %v1083
        %v1085 = vlaneseq
        %v1086 = vshrl.u32 %v1085, 7
        %v1087 = vsub.s32 5, %v1086
        %v1088 = vrot.slane %v937, %v1087
        %1090 = vbcast.lane.b32.xlu0 %v1088, 256
        %v1091 = vpop.permute.xlu0 %1090
        %s1093 = sor.u32 256, 8
        %1094 = vbcast.lane.b32.xlu0 %v1088, %s1093
        %v1095 = vpop.permute.xlu0 %1094
        %v1096 = vlaneseq
        %v1097 = vshrl.u32 %v1096, 7
        %v1098 = vsub.s32 5, %v1097
        %v1099 = vrot.slane %v935, %v1098
        %vm1100 = vcmp.eq.s32.totalorder %v271, %v1099
        %vm1101 = vcmp.eq.s32.totalorder %v272, %v1099
        %v1102 = vsel %vm1100, %v1091, 0.0
        %v1103 = vsel %vm1101, %v1095, 0.0
        %v1104 = vsel %vm301, %v1102, 0.0
        %v1105 = vsel %vm301, %v1103, 0.0
        %v1106 = vadd.f32 %v1104, %v1105
        %v1107 = vrot.slane %v1106, 4
        %v1108 = vadd.f32 %v1106, %v1107
        %v1109 = vrot.slane %v1108, 2
        %v1110 = vadd.f32 %v1108, %v1109
        %v1111 = vrot.slane %v1110, 1
        %v1112 = vadd.f32 %v1110, %v1111
        %v1113 = vadd.f32 %v1084, %v1112
        %v1114 = vlaneseq
        %v1115 = vshrl.u32 %v1114, 7
        %v1116 = vsub.s32 6, %v1115
        %v1117 = vrot.slane %v937, %v1116
        %1119 = vbcast.lane.b32.xlu0 %v1117, 256
        %v1120 = vpop.permute.xlu0 %1119
        %s1122 = sor.u32 256, 8
        %1123 = vbcast.lane.b32.xlu0 %v1117, %s1122
        %v1124 = vpop.permute.xlu0 %1123
        %v1125 = vlaneseq
        %v1126 = vshrl.u32 %v1125, 7
        %v1127 = vsub.s32 6, %v1126
        %v1128 = vrot.slane %v935, %v1127
        %vm1129 = vcmp.eq.s32.totalorder %v271, %v1128
        %vm1130 = vcmp.eq.s32.totalorder %v272, %v1128
        %v1131 = vsel %vm1129, %v1120, 0.0
        %v1132 = vsel %vm1130, %v1124, 0.0
        %v1133 = vsel %vm301, %v1131, 0.0
        %v1134 = vsel %vm301, %v1132, 0.0
        %v1135 = vadd.f32 %v1133, %v1134
        %v1136 = vrot.slane %v1135, 4
        %v1137 = vadd.f32 %v1135, %v1136
        %v1138 = vrot.slane %v1137, 2
        %v1139 = vadd.f32 %v1137, %v1138
        %v1140 = vrot.slane %v1139, 1
        %v1141 = vadd.f32 %v1139, %v1140
        %v1142 = vadd.f32 %v1113, %v1141
        %v1143 = vlaneseq
        %v1144 = vshrl.u32 %v1143, 7
        %v1145 = vsub.s32 7, %v1144
        %v1146 = vrot.slane %v937, %v1145
        %1148 = vbcast.lane.b32.xlu0 %v1146, 256
        %v1149 = vpop.permute.xlu0 %1148
        %s1151 = sor.u32 256, 8
        %1152 = vbcast.lane.b32.xlu0 %v1146, %s1151
        %v1153 = vpop.permute.xlu0 %1152
        %v1154 = vlaneseq
        %v1155 = vshrl.u32 %v1154, 7
        %v1156 = vsub.s32 7, %v1155
        %v1157 = vrot.slane %v935, %v1156
        %vm1158 = vcmp.eq.s32.totalorder %v271, %v1157
        %vm1159 = vcmp.eq.s32.totalorder %v272, %v1157
        %v1160 = vsel %vm1158, %v1149, 0.0
        %v1161 = vsel %vm1159, %v1153, 0.0
        %v1162 = vsel %vm301, %v1160, 0.0
        %v1163 = vsel %vm301, %v1161, 0.0
        %v1164 = vadd.f32 %v1162, %v1163
        %v1165 = vrot.slane %v1164, 4
        %v1166 = vadd.f32 %v1164, %v1165
        %v1167 = vrot.slane %v1166, 2
        %v1168 = vadd.f32 %v1166, %v1167
        %v1169 = vrot.slane %v1168, 1
        %v1170 = vadd.f32 %v1168, %v1169
        %v1171 = vadd.f32 %v1142, %v1170
        %vm1172 = vcmp.gt.f32.partialorder %v1171, 0.0
        %v1173 = vsel %vm1172, %v1171, 1.0
        %v1174 = vrcp.pop %v1173
        %v1175 = vmul.f32 5.625, %v1174
        %v1176 = vsel %vm1172, %v1175, 0.0
        %v1177 = vadd.f32 %v1176, 0.5
        %v1178 = vsel %vm301, %v1177, inf
        %1179 = vmin.xlane.f32.xlu0 %v1178
        %v1180 = vpop.xlane.xlu0 %1179
        %s1181 = vtos %v1180
        %v1182 = vstv %s1181
        %vm1183 = vcmp.eq.f32.partialorder %v1177, %v1182
        %v1184 = vsel %vm1183, %v274, 20
        %v1185 = vsel %vm301, %v1184, 2147483647
        %v1186 = vand.u32 %v1185, 65535
        %v1187 = vshra.s32 %v1185, 16
        %v1188 = vcvt.s32.f32 %v1186
        %v1189 = vcvt.s32.f32 %v1187
        %1190 = vmin.xlane.f32.xlu0 %v1189
        %v1191 = vpop.xlane.xlu0 %1190
        %vm1192 = vcmp.eq.f32.partialorder %v1189, %v1191
        %v1193 = vsel %vm1192, %v1188, inf
        %1194 = vmin.xlane.f32.xlu0 %v1193
        %v1195 = vpop.xlane.xlu0 %1194
        %v1196 = vcvt.f32.s32 %v1195
        %v1197 = vcvt.f32.s32 %v1191
        %v1198 = vshll.u32 %v1197, 16
        %v1199 = vadd.s32 %v1198, %v1196
        %s1200 = vtos %v1199
        %v1201 = vsel %vm544, %v1177, 0.0
        %1202 = vadd.xlane.f32.xlu0 %v1201
        %v1203 = vpop.xlane.xlu0 %1202
        %v1204 = vrot.slane %v1203, 4
        %v1205 = vadd.f32 %v1203, %v1204
        %v1206 = vrot.slane %v1205, 2
        %v1207 = vadd.f32 %v1205, %v1206
        %v1208 = vrot.slane %v1207, 1
        %v1209 = vadd.f32 %v1207, %v1208
        %s1210 = vtos %v1209
        %v1211 = vstv %s1210
        %v1212 = vrcp.pop %v1211
        %v1213 = vmul.f32 %v1177, %v1212
        %v1214 = vsel %vm276, %v1213, 0.0
        %v1215 = vsel %vm277, %v1213, 0.0
        %v1216 = vsel %vm278, %v1213, 0.0
        %v1217 = vsel %vm301, %v1214, 0.0
        %1218 = vadd.xlane.f32.xlu0 %v1217
        %v1219 = vpop.xlane.xlu0 %1218
        %v1220 = vsel %vm301, %v1215, 0.0
        %1221 = vadd.xlane.f32.xlu0 %v1220
        %v1222 = vpop.xlane.xlu0 %1221
        %v1223 = vsel %vm567, %v1216, 0.0
        %1224 = vadd.xlane.f32.xlu0 %v1223
        %v1225 = vpop.xlane.xlu0 %1224
        %v1227 = vlaneseq
        %v1228 = vshrl.u32 %v1227, 7
        %v1229 = vsub.s32 0, %v1228
        %v1230 = vrot.slane %v939, %v1229
        %vm1232 = vcmp.lt.f32.partialorder %v1219, %v1230
        %vm1233 = vcmp.lt.f32.partialorder %v1222, %v1230
        %vm1234 = vcmp.lt.f32.partialorder %v1225, %v1230
        %v1235 = vsel %vm1232, 1, 0
        %v1236 = vsel %vm1233, 1, 0
        %v1237 = vsel %vm1234, 1, 0
        %v1238 = vcvt.s32.f32 %v1235
        %v1239 = vcvt.s32.f32 %v1236
        %v1240 = vcvt.s32.f32 %v1237
        %v1241 = vsel %vm301, %v1238, 0.0
        %v1242 = vsel %vm301, %v1239, 0.0
        %v1243 = vadd.f32 %v1241, %v1242
        %v1244 = vsel %vm567, %v1240, 0.0
        %v1245 = vadd.f32 %v1243, %v1244
        %v1246 = vrot.slane %v1245, 4
        %v1247 = vadd.f32 %v1245, %v1246
        %v1248 = vrot.slane %v1247, 2
        %v1249 = vadd.f32 %v1247, %v1248
        %v1250 = vrot.slane %v1249, 1
        %v1251 = vadd.f32 %v1249, %v1250
        %v1252 = vmin.f32 %v1251, 19.0
        %s1253 = scvt.s32.f32 %s1200
        %v1254 = vstv %s1253
        %v1255 = vsel %vm599, %v1254, 0.0
        %v1256 = vsel %vm598, %v1182, %v1255
        %s1257 = scalar_lea.vmem %s265, 16 [#allocation8]
        %1258 = vst.msk [vmem:[%s1257] sm:$0x1] %vm544, %v1177
        %1259 = vst.msk [vmem:[%s1257 + $0x1] sm:$0x1] %vm544, %v1252
        %1260 = vst.msk [vmem:[%s1257 + $0x2] sm:$0x1] %vm544, %v1256
        %s1261 = scalar_lea.vmem %s215, 24 [#allocation2]
        %v1262 = vld [vmem:[%s1261] sm:$0xff]
        %s1263 = scalar_lea.vmem %s224, 24 [#allocation5]
        %v1264 = vld [vmem:[%s1263] sm:$0xff]
        %s1265 = scalar_lea.vmem %s233, 3 [#allocation7]
        %v1266 = vld [vmem:[%s1265] sm:$0x1]
        %v1267 = vlaneseq
        %v1268 = vshrl.u32 %v1267, 7
        %v1269 = vsub.s32 0, %v1268
        %v1270 = vrot.slane %v1264, %v1269
        %1272 = vbcast.lane.b32.xlu0 %v1270, 256
        %v1273 = vpop.permute.xlu0 %1272
        %s1275 = sor.u32 256, 8
        %1276 = vbcast.lane.b32.xlu0 %v1270, %s1275
        %v1277 = vpop.permute.xlu0 %1276
        %v1278 = vlaneseq
        %v1279 = vshrl.u32 %v1278, 7
        %v1280 = vsub.s32 0, %v1279
        %v1281 = vrot.slane %v1262, %v1280
        %vm1282 = vcmp.eq.s32.totalorder %v271, %v1281
        %vm1283 = vcmp.eq.s32.totalorder %v272, %v1281
        %v1284 = vsel %vm1282, %v1273, 0.0
        %v1285 = vsel %vm1283, %v1277, 0.0
        %v1286 = vsel %vm301, %v1284, 0.0
        %v1287 = vsel %vm301, %v1285, 0.0
        %v1288 = vadd.f32 %v1286, %v1287
        %v1289 = vrot.slane %v1288, 4
        %v1290 = vadd.f32 %v1288, %v1289
        %v1291 = vrot.slane %v1290, 2
        %v1292 = vadd.f32 %v1290, %v1291
        %v1293 = vrot.slane %v1292, 1
        %v1294 = vadd.f32 %v1292, %v1293
        %v1295 = vadd.f32 %v1294, 0.0
        %v1296 = vlaneseq
        %v1297 = vshrl.u32 %v1296, 7
        %v1298 = vsub.s32 1, %v1297
        %v1299 = vrot.slane %v1264, %v1298
        %1301 = vbcast.lane.b32.xlu0 %v1299, 256
        %v1302 = vpop.permute.xlu0 %1301
        %s1304 = sor.u32 256, 8
        %1305 = vbcast.lane.b32.xlu0 %v1299, %s1304
        %v1306 = vpop.permute.xlu0 %1305
        %v1307 = vlaneseq
        %v1308 = vshrl.u32 %v1307, 7
        %v1309 = vsub.s32 1, %v1308
        %v1310 = vrot.slane %v1262, %v1309
        %vm1311 = vcmp.eq.s32.totalorder %v271, %v1310
        %vm1312 = vcmp.eq.s32.totalorder %v272, %v1310
        %v1313 = vsel %vm1311, %v1302, 0.0
        %v1314 = vsel %vm1312, %v1306, 0.0
        %v1315 = vsel %vm301, %v1313, 0.0
        %v1316 = vsel %vm301, %v1314, 0.0
        %v1317 = vadd.f32 %v1315, %v1316
        %v1318 = vrot.slane %v1317, 4
        %v1319 = vadd.f32 %v1317, %v1318
        %v1320 = vrot.slane %v1319, 2
        %v1321 = vadd.f32 %v1319, %v1320
        %v1322 = vrot.slane %v1321, 1
        %v1323 = vadd.f32 %v1321, %v1322
        %v1324 = vadd.f32 %v1295, %v1323
        %v1325 = vlaneseq
        %v1326 = vshrl.u32 %v1325, 7
        %v1327 = vsub.s32 2, %v1326
        %v1328 = vrot.slane %v1264, %v1327
        %1330 = vbcast.lane.b32.xlu0 %v1328, 256
        %v1331 = vpop.permute.xlu0 %1330
        %s1333 = sor.u32 256, 8
        %1334 = vbcast.lane.b32.xlu0 %v1328, %s1333
        %v1335 = vpop.permute.xlu0 %1334
        %v1336 = vlaneseq
        %v1337 = vshrl.u32 %v1336, 7
        %v1338 = vsub.s32 2, %v1337
        %v1339 = vrot.slane %v1262, %v1338
        %vm1340 = vcmp.eq.s32.totalorder %v271, %v1339
        %vm1341 = vcmp.eq.s32.totalorder %v272, %v1339
        %v1342 = vsel %vm1340, %v1331, 0.0
        %v1343 = vsel %vm1341, %v1335, 0.0
        %v1344 = vsel %vm301, %v1342, 0.0
        %v1345 = vsel %vm301, %v1343, 0.0
        %v1346 = vadd.f32 %v1344, %v1345
        %v1347 = vrot.slane %v1346, 4
        %v1348 = vadd.f32 %v1346, %v1347
        %v1349 = vrot.slane %v1348, 2
        %v1350 = vadd.f32 %v1348, %v1349
        %v1351 = vrot.slane %v1350, 1
        %v1352 = vadd.f32 %v1350, %v1351
        %v1353 = vadd.f32 %v1324, %v1352
        %v1354 = vlaneseq
        %v1355 = vshrl.u32 %v1354, 7
        %v1356 = vsub.s32 3, %v1355
        %v1357 = vrot.slane %v1264, %v1356
        %1359 = vbcast.lane.b32.xlu0 %v1357, 256
        %v1360 = vpop.permute.xlu0 %1359
        %s1362 = sor.u32 256, 8
        %1363 = vbcast.lane.b32.xlu0 %v1357, %s1362
        %v1364 = vpop.permute.xlu0 %1363
        %v1365 = vlaneseq
        %v1366 = vshrl.u32 %v1365, 7
        %v1367 = vsub.s32 3, %v1366
        %v1368 = vrot.slane %v1262, %v1367
        %vm1369 = vcmp.eq.s32.totalorder %v271, %v1368
        %vm1370 = vcmp.eq.s32.totalorder %v272, %v1368
        %v1371 = vsel %vm1369, %v1360, 0.0
        %v1372 = vsel %vm1370, %v1364, 0.0
        %v1373 = vsel %vm301, %v1371, 0.0
        %v1374 = vsel %vm301, %v1372, 0.0
        %v1375 = vadd.f32 %v1373, %v1374
        %v1376 = vrot.slane %v1375, 4
        %v1377 = vadd.f32 %v1375, %v1376
        %v1378 = vrot.slane %v1377, 2
        %v1379 = vadd.f32 %v1377, %v1378
        %v1380 = vrot.slane %v1379, 1
        %v1381 = vadd.f32 %v1379, %v1380
        %v1382 = vadd.f32 %v1353, %v1381
        %v1383 = vlaneseq
        %v1384 = vshrl.u32 %v1383, 7
        %v1385 = vsub.s32 4, %v1384
        %v1386 = vrot.slane %v1264, %v1385
        %1388 = vbcast.lane.b32.xlu0 %v1386, 256
        %v1389 = vpop.permute.xlu0 %1388
        %s1391 = sor.u32 256, 8
        %1392 = vbcast.lane.b32.xlu0 %v1386, %s1391
        %v1393 = vpop.permute.xlu0 %1392
        %v1394 = vlaneseq
        %v1395 = vshrl.u32 %v1394, 7
        %v1396 = vsub.s32 4, %v1395
        %v1397 = vrot.slane %v1262, %v1396
        %vm1398 = vcmp.eq.s32.totalorder %v271, %v1397
        %vm1399 = vcmp.eq.s32.totalorder %v272, %v1397
        %v1400 = vsel %vm1398, %v1389, 0.0
        %v1401 = vsel %vm1399, %v1393, 0.0
        %v1402 = vsel %vm301, %v1400, 0.0
        %v1403 = vsel %vm301, %v1401, 0.0
        %v1404 = vadd.f32 %v1402, %v1403
        %v1405 = vrot.slane %v1404, 4
        %v1406 = vadd.f32 %v1404, %v1405
        %v1407 = vrot.slane %v1406, 2
        %v1408 = vadd.f32 %v1406, %v1407
        %v1409 = vrot.slane %v1408, 1
        %v1410 = vadd.f32 %v1408, %v1409
        %v1411 = vadd.f32 %v1382, %v1410
        %v1412 = vlaneseq
        %v1413 = vshrl.u32 %v1412, 7
        %v1414 = vsub.s32 5, %v1413
        %v1415 = vrot.slane %v1264, %v1414
        %1417 = vbcast.lane.b32.xlu0 %v1415, 256
        %v1418 = vpop.permute.xlu0 %1417
        %s1420 = sor.u32 256, 8
        %1421 = vbcast.lane.b32.xlu0 %v1415, %s1420
        %v1422 = vpop.permute.xlu0 %1421
        %v1423 = vlaneseq
        %v1424 = vshrl.u32 %v1423, 7
        %v1425 = vsub.s32 5, %v1424
        %v1426 = vrot.slane %v1262, %v1425
        %vm1427 = vcmp.eq.s32.totalorder %v271, %v1426
        %vm1428 = vcmp.eq.s32.totalorder %v272, %v1426
        %v1429 = vsel %vm1427, %v1418, 0.0
        %v1430 = vsel %vm1428, %v1422, 0.0
        %v1431 = vsel %vm301, %v1429, 0.0
        %v1432 = vsel %vm301, %v1430, 0.0
        %v1433 = vadd.f32 %v1431, %v1432
        %v1434 = vrot.slane %v1433, 4
        %v1435 = vadd.f32 %v1433, %v1434
        %v1436 = vrot.slane %v1435, 2
        %v1437 = vadd.f32 %v1435, %v1436
        %v1438 = vrot.slane %v1437, 1
        %v1439 = vadd.f32 %v1437, %v1438
        %v1440 = vadd.f32 %v1411, %v1439
        %v1441 = vlaneseq
        %v1442 = vshrl.u32 %v1441, 7
        %v1443 = vsub.s32 6, %v1442
        %v1444 = vrot.slane %v1264, %v1443
        %1446 = vbcast.lane.b32.xlu0 %v1444, 256
        %v1447 = vpop.permute.xlu0 %1446
        %s1449 = sor.u32 256, 8
        %1450 = vbcast.lane.b32.xlu0 %v1444, %s1449
        %v1451 = vpop.permute.xlu0 %1450
        %v1452 = vlaneseq
        %v1453 = vshrl.u32 %v1452, 7
        %v1454 = vsub.s32 6, %v1453
        %v1455 = vrot.slane %v1262, %v1454
        %vm1456 = vcmp.eq.s32.totalorder %v271, %v1455
        %vm1457 = vcmp.eq.s32.totalorder %v272, %v1455
        %v1458 = vsel %vm1456, %v1447, 0.0
        %v1459 = vsel %vm1457, %v1451, 0.0
        %v1460 = vsel %vm301, %v1458, 0.0
        %v1461 = vsel %vm301, %v1459, 0.0
        %v1462 = vadd.f32 %v1460, %v1461
        %v1463 = vrot.slane %v1462, 4
        %v1464 = vadd.f32 %v1462, %v1463
        %v1465 = vrot.slane %v1464, 2
        %v1466 = vadd.f32 %v1464, %v1465
        %v1467 = vrot.slane %v1466, 1
        %v1468 = vadd.f32 %v1466, %v1467
        %v1469 = vadd.f32 %v1440, %v1468
        %v1470 = vlaneseq
        %v1471 = vshrl.u32 %v1470, 7
        %v1472 = vsub.s32 7, %v1471
        %v1473 = vrot.slane %v1264, %v1472
        %1475 = vbcast.lane.b32.xlu0 %v1473, 256
        %v1476 = vpop.permute.xlu0 %1475
        %s1478 = sor.u32 256, 8
        %1479 = vbcast.lane.b32.xlu0 %v1473, %s1478
        %v1480 = vpop.permute.xlu0 %1479
        %v1481 = vlaneseq
        %v1482 = vshrl.u32 %v1481, 7
        %v1483 = vsub.s32 7, %v1482
        %v1484 = vrot.slane %v1262, %v1483
        %vm1485 = vcmp.eq.s32.totalorder %v271, %v1484
        %vm1486 = vcmp.eq.s32.totalorder %v272, %v1484
        %v1487 = vsel %vm1485, %v1476, 0.0
        %v1488 = vsel %vm1486, %v1480, 0.0
        %v1489 = vsel %vm301, %v1487, 0.0
        %v1490 = vsel %vm301, %v1488, 0.0
        %v1491 = vadd.f32 %v1489, %v1490
        %v1492 = vrot.slane %v1491, 4
        %v1493 = vadd.f32 %v1491, %v1492
        %v1494 = vrot.slane %v1493, 2
        %v1495 = vadd.f32 %v1493, %v1494
        %v1496 = vrot.slane %v1495, 1
        %v1497 = vadd.f32 %v1495, %v1496
        %v1498 = vadd.f32 %v1469, %v1497
        %vm1499 = vcmp.gt.f32.partialorder %v1498, 0.0
        %v1500 = vsel %vm1499, %v1498, 1.0
        %v1501 = vrcp.pop %v1500
        %v1502 = vmul.f32 5.625, %v1501
        %v1503 = vsel %vm1499, %v1502, 0.0
        %v1504 = vadd.f32 %v1503, 0.5
        %v1505 = vsel %vm301, %v1504, inf
        %1506 = vmin.xlane.f32.xlu0 %v1505
        %v1507 = vpop.xlane.xlu0 %1506
        %s1508 = vtos %v1507
        %v1509 = vstv %s1508
        %vm1510 = vcmp.eq.f32.partialorder %v1504, %v1509
        %v1511 = vsel %vm1510, %v274, 20
        %v1512 = vsel %vm301, %v1511, 2147483647
        %v1513 = vand.u32 %v1512, 65535
        %v1514 = vshra.s32 %v1512, 16
        %v1515 = vcvt.s32.f32 %v1513
        %v1516 = vcvt.s32.f32 %v1514
        %1517 = vmin.xlane.f32.xlu0 %v1516
        %v1518 = vpop.xlane.xlu0 %1517
        %vm1519 = vcmp.eq.f32.partialorder %v1516, %v1518
        %v1520 = vsel %vm1519, %v1515, inf
        %1521 = vmin.xlane.f32.xlu0 %v1520
        %v1522 = vpop.xlane.xlu0 %1521
        %v1523 = vcvt.f32.s32 %v1522
        %v1524 = vcvt.f32.s32 %v1518
        %v1525 = vshll.u32 %v1524, 16
        %v1526 = vadd.s32 %v1525, %v1523
        %s1527 = vtos %v1526
        %v1528 = vsel %vm544, %v1504, 0.0
        %1529 = vadd.xlane.f32.xlu0 %v1528
        %v1530 = vpop.xlane.xlu0 %1529
        %v1531 = vrot.slane %v1530, 4
        %v1532 = vadd.f32 %v1530, %v1531
        %v1533 = vrot.slane %v1532, 2
        %v1534 = vadd.f32 %v1532, %v1533
        %v1535 = vrot.slane %v1534, 1
        %v1536 = vadd.f32 %v1534, %v1535
        %s1537 = vtos %v1536
        %v1538 = vstv %s1537
        %v1539 = vrcp.pop %v1538
        %v1540 = vmul.f32 %v1504, %v1539
        %v1541 = vsel %vm276, %v1540, 0.0
        %v1542 = vsel %vm277, %v1540, 0.0
        %v1543 = vsel %vm278, %v1540, 0.0
        %v1544 = vsel %vm301, %v1541, 0.0
        %1545 = vadd.xlane.f32.xlu0 %v1544
        %v1546 = vpop.xlane.xlu0 %1545
        %v1547 = vsel %vm301, %v1542, 0.0
        %1548 = vadd.xlane.f32.xlu0 %v1547
        %v1549 = vpop.xlane.xlu0 %1548
        %v1550 = vsel %vm567, %v1543, 0.0
        %1551 = vadd.xlane.f32.xlu0 %v1550
        %v1552 = vpop.xlane.xlu0 %1551
        %v1554 = vlaneseq
        %v1555 = vshrl.u32 %v1554, 7
        %v1556 = vsub.s32 0, %v1555
        %v1557 = vrot.slane %v1266, %v1556
        %vm1559 = vcmp.lt.f32.partialorder %v1546, %v1557
        %vm1560 = vcmp.lt.f32.partialorder %v1549, %v1557
        %vm1561 = vcmp.lt.f32.partialorder %v1552, %v1557
        %v1562 = vsel %vm1559, 1, 0
        %v1563 = vsel %vm1560, 1, 0
        %v1564 = vsel %vm1561, 1, 0
        %v1565 = vcvt.s32.f32 %v1562
        %v1566 = vcvt.s32.f32 %v1563
        %v1567 = vcvt.s32.f32 %v1564
        %v1568 = vsel %vm301, %v1565, 0.0
        %v1569 = vsel %vm301, %v1566, 0.0
        %v1570 = vadd.f32 %v1568, %v1569
        %v1571 = vsel %vm567, %v1567, 0.0
        %v1572 = vadd.f32 %v1570, %v1571
        %v1573 = vrot.slane %v1572, 4
        %v1574 = vadd.f32 %v1572, %v1573
        %v1575 = vrot.slane %v1574, 2
        %v1576 = vadd.f32 %v1574, %v1575
        %v1577 = vrot.slane %v1576, 1
        %v1578 = vadd.f32 %v1576, %v1577
        %v1579 = vmin.f32 %v1578, 19.0
        %s1580 = scvt.s32.f32 %s1527
        %v1581 = vstv %s1580
        %v1582 = vsel %vm599, %v1581, 0.0
        %v1583 = vsel %vm598, %v1509, %v1582
        %s1584 = scalar_lea.vmem %s265, 24 [#allocation8]
        %1585 = vst.msk [vmem:[%s1584] sm:$0x1] %vm544, %v1504
        %1586 = vst.msk [vmem:[%s1584 + $0x1] sm:$0x1] %vm544, %v1579
        %1587 = vst.msk [vmem:[%s1584 + $0x2] sm:$0x1] %vm544, %v1583
        %s1588 = sand.u32 %s109, 1
        %s1589 = scalar_lea.sflag [#allocation4], %s1588
        %s1590 = sand.u32 %s109, 1
        %s1591 = smul.addr %s1590, 32
        %s1592 = scalar_lea.vmem [#allocation8], %s1591
        // Predicated region
        $region45: #{tpu_custom_call.1} parent=31 // pred_check
          %p1593 = pneg %p119
        $region46: #{tpu_custom_call.1} parent=31 // pred_check_branch
          %1595 = sbr.rel (%p1593) target = $region48
        $region47: #{tpu_custom_call.1} parent=31 // pred_region
          %s1596 = smul.u32 4, %s23
          %s1598 = ssub.s32 512, 512
          %1599 = vsyncadd %s1589, %s1598
          %s1600 = smul.addr %s1596, 128
          %s1601 = scalar_lea.hbm %s3, %s1600
          %s1602 = sshll.u32 %s1592, 4
          %s1603 = int_to_ptr.vmem [resolvable:$true] %s1602
          %1608 = dma.vmem_to_hbm [thread:$0]  %s1603, 512, %s1601, %s1589, 128, 128, 8
        $region48: #{tpu_custom_call.1} parent=31 // pred_fallthru
          _
      $region32: #{tpu_custom_call.1} parent=5 // pred_fallthru
        _
      %p1609 = scmp.le.s32.totalorder 2, %s18
      // Predicated region
      $region49: #{tpu_custom_call.1} parent=5 // pred_check
        %p1610 = pneg %p1609
      $region50: #{tpu_custom_call.1} parent=5 // pred_check_branch
        %1612 = sbr.rel (%p1610) target = $region52
      $region51: #{tpu_custom_call.1} parent=5 // pred_region
        %s1613 = ssub.s32 %s18, 2
        // Predicated region
        $region53: #{tpu_custom_call.1} parent=51 // pred_check
          %p1614 = pneg %p125
        $region54: #{tpu_custom_call.1} parent=51 // pred_check_branch
          %1616 = sbr.rel (%p1614) target = $region56
        $region55: #{tpu_custom_call.1} parent=51 // pred_region
          %s1617 = sand.u32 %s110, 1
          %s1618 = scalar_lea.sflag [#allocation4], %s1617
          %s1619 = sand.u32 %s110, 1
          %s1620 = smul.addr %s1619, 32
          %s1621 = scalar_lea.vmem [#allocation8], %s1620
          %1622 = dma.done %s1618, 512
        $region56: #{tpu_custom_call.1} parent=51 // pred_fallthru
          _
      $region52: #{tpu_custom_call.1} parent=5 // pred_fallthru
        _
    $region6: #{tpu_custom_call.1} parent=1 // loop_footer
      %s22 = sadd.s32 1, %s18
    $region7: #{tpu_custom_call.1} parent=1 // loop_footer_branch
      %17 = sbr.rel target = $region3
    $region8: #{tpu_custom_call.1} parent=1 // loop_exit
      _
    %1623 = vsyncpa [#allocation3], 1
    %s1624 = scalar_lea.sflag [#allocation3], 1
    %1625 = vsyncpa %s1624, 1
    %1626 = vsyncpa [#allocation6], 1
    %s1627 = scalar_lea.sflag [#allocation6], 1
    %1628 = vsyncpa %s1627, 1
    %1629 = vsyncpa [#allocation4], 1
    %s1630 = scalar_lea.sflag [#allocation4], 1
    %1631 = vsyncpa %s1630, 1

</llo_original>
